<compile_context>
chip_gen: v5e
topology: v5e:2x2
jax: 0.10.0
libtpu: 0.0.40
codegen_flags: <defaults>
</compile_context>

<pallas_src>
import functools

import jax
import jax.numpy as jnp
from jax import lax
from jax.experimental import pallas as pl
from jax.experimental.pallas import tpu as pltpu

LANE = 128  # TPU lane width; fc3 output padded to this for an unmasked store


def _round8(v):
    return ((v + 7) // 8) * 8


def _wmat_offsets(fin, c, hidden):
    """Row offsets (8-aligned) of each weight block inside the packed WMAT."""
    offs, r = {}, 0
    for name, rows in (("w1", fin), ("w2", c), ("f1", c), ("f2", hidden), ("f3", 32)):
        offs[name] = r
        r = _round8(r + rows)
    return offs, r


def _elu(y):
    return jnp.where(y > 0, y, jnp.exp(jnp.minimum(y, 0.0)) - 1.0)


# ----------------------------------------------------------------------------
# Single fused kernel: GATv2 layer 1 + res_fc1 + ELU, GATv2 layer 2 + identity
# residual + ELU, 3-layer MLP head.  All operands resident in VMEM.
# ----------------------------------------------------------------------------
def fused_gat_kernel(x_ref, graph_ref, const_ref, wmat_ref, vec_ref, out_ref, *, heads):
    n, fin = x_ref.shape
    c = const_ref.shape[1] // n          # hidden_channels * heads
    hidden = c // heads
    offs, _ = _wmat_offsets(fin, c, hidden)

    x = x_ref[...]                                            # (N, Fin)
    graph = graph_ref[...]                                    # (N, 2N)
    ea = graph[:, 0:n]                                        # dense edge attrs (+ self loops)
    bias = graph[:, n:2 * n]                                  # additive mask: 0 / -1e30

    tile_c = const_ref[0:c, :]                                # (C, N*C): tile(eye(C))
    mask_j = const_ref[c:c + n, :]                            # (N, N*C): repeat(eye(N), C)
    prows = const_ref[c + n:c + n + 4, :]                     # (4, N*C): we1,we2,att1,att2 (tiled)
    we1_t, we2_t = prows[0:1, :], prows[1:2, :]
    att1_t, att2_t = prows[2:3, :], prows[3:4, :]

    vec = vec_ref[...]                                        # (7, 128)
    b1 = vec[0:1, 0:3 * c]
    b2 = vec[1:2, 0:2 * c]
    bo1 = vec[2:3, 0:c]
    bo2 = vec[3:4, 0:c]
    f1b = vec[4:5, 0:hidden]
    f2b = vec[5:6, 0:32]
    f3b = vec[6:7, :]

    w1 = wmat_ref[offs["w1"]:offs["w1"] + fin, 0:3 * c]       # [lin_l | lin_r | res_fc1]
    w2 = wmat_ref[offs["w2"]:offs["w2"] + c, 0:2 * c]         # [lin_l | lin_r]
    f1w = wmat_ref[offs["f1"]:offs["f1"] + c, 0:hidden]
    f2w = wmat_ref[offs["f2"]:offs["f2"] + hidden, 0:32]
    f3w = wmat_ref[offs["f3"]:offs["f3"] + 32, :]             # (32, 128) lane-padded

    def gatv2(xl, xr, we_t, att_t, bo):
        # pre[i, j*C+c] = xr[i,c] + xl[j,c] + ea[i,j]*we[c]   (lane-dense (N, N*C))
        term_r = jnp.dot(xr, tile_c, preferred_element_type=jnp.float32)
        xl_flat = jnp.sum(jnp.dot(xl, tile_c, preferred_element_type=jnp.float32) * mask_j,
                          axis=0, keepdims=True)              # (1, N*C) = flatten(xl)
        edge = jnp.dot(ea, mask_j, preferred_element_type=jnp.float32) * we_t
        pre = term_r + xl_flat + edge
        e = jnp.where(pre > 0, pre, 0.2 * pre)                # leaky_relu(0.2)
        # score[i,j] = sum_c att[c] * e[i, j*C+c]  (trans-B contraction with mask_j)
        score = lax.dot_general(e * att_t, mask_j, (((1,), (1,)), ((), ())),
                                preferred_element_type=jnp.float32) + bias
        m = jnp.max(score, axis=1, keepdims=True)             # self loop => finite
        p = jnp.exp(score - m)                                # masked entries -> 0
        l = jnp.sum(p, axis=1, keepdims=True)
        alpha = p * pl.reciprocal(l, approx=False)
        return jnp.dot(alpha, xl, preferred_element_type=jnp.float32) + bo

    # layer 1: lin_l / lin_r / res_fc1 fused in one matmul
    h = jnp.dot(x, w1, preferred_element_type=jnp.float32) + b1          # (N, 3C)
    xl1, xr1, res1 = h[:, 0:c], h[:, c:2 * c], h[:, 2 * c:3 * c]
    h1 = _elu(gatv2(xl1, xr1, we1_t, att1_t, bo1) + res1)

    # layer 2: lin_l / lin_r fused, identity residual (res_fc2 is None)
    g = jnp.dot(h1, w2, preferred_element_type=jnp.float32) + b2         # (N, 2C)
    xl2, xr2 = g[:, 0:c], g[:, c:2 * c]
    h2 = _elu(gatv2(xl2, xr2, we2_t, att2_t, bo2) + h1)

    # MLP head: Linear -> ReLU -> Linear -> ReLU -> Linear (lane-padded out)
    f = jnp.maximum(jnp.dot(h2, f1w, preferred_element_type=jnp.float32) + f1b, 0.0)
    f = jnp.maximum(jnp.dot(f, f2w, preferred_element_type=jnp.float32) + f2b, 0.0)
    out_ref[...] = jnp.dot(f, f3w, preferred_element_type=jnp.float32) + f3b


def fused_forward(x, graph, kp, heads):
    n = x.shape[0]
    vmem = pl.BlockSpec(memory_space=pltpu.MemorySpace.VMEM)
    kernel = functools.partial(fused_gat_kernel, heads=heads)
    return pl.pallas_call(
        kernel,
        out_shape=jax.ShapeDtypeStruct((n, LANE), jnp.float32),
        in_specs=[vmem] * 5,
        out_specs=vmem,
    )(x, graph, kp["const"], kp["wmat"], kp["vec"])


# ----------------------------------------------------------------------------
# Parameters (deterministic, glorot-ish scaled normals) + kernel-ready packing.
# ----------------------------------------------------------------------------
def _lin(key, fan_in, fan_out, bias=True):
    kw, kb = jax.random.split(key)
    w = jax.random.normal(kw, (fan_in, fan_out), jnp.float32) / jnp.sqrt(jnp.float32(fan_in))
    b = (jax.random.normal(kb, (1, fan_out), jnp.float32) * 0.01) if bias else jnp.zeros((1, fan_out), jnp.float32)
    return w, b


def init_params(key, in_channels, hidden_channels, out_channels, heads=1):
    c = hidden_channels * heads
    keys = jax.random.split(key, 12)
    p = {}
    p["g1_wl"], p["g1_bl"] = _lin(keys[0], in_channels, c)
    p["g1_wr"], p["g1_br"] = _lin(keys[1], in_channels, c)
    p["g1_we"], _ = _lin(keys[2], 1, c, bias=False)
    p["g1_att"] = jax.random.normal(keys[3], (1, c), jnp.float32) / jnp.sqrt(jnp.float32(c))
    p["g1_bo"] = jnp.zeros((1, c), jnp.float32)
    p["g2_wl"], p["g2_bl"] = _lin(keys[4], c, c)
    p["g2_wr"], p["g2_br"] = _lin(keys[5], c, c)
    p["g2_we"], _ = _lin(keys[6], 1, c, bias=False)
    p["g2_att"] = jax.random.normal(keys[7], (1, c), jnp.float32) / jnp.sqrt(jnp.float32(c))
    p["g2_bo"] = jnp.zeros((1, c), jnp.float32)
    p["res1_w"], p["res1_b"] = _lin(keys[8], in_channels, c)      # res_fc1; res_fc2 is None
    p["fc1_w"], p["fc1_b"] = _lin(keys[9], c, hidden_channels)
    p["fc2_w"], p["fc2_b"] = _lin(keys[10], hidden_channels, 32)
    p["fc3_w"], p["fc3_b"] = _lin(keys[11], 32, out_channels)
    return p


def pack_params(p, num_nodes, in_channels, hidden_channels, out_channels, heads=1):
    """Pack all weights into 3 kernel operands: WMAT, VEC, CONST."""
    c = hidden_channels * heads
    n = num_nodes
    offs, total = _wmat_offsets(in_channels, c, hidden_channels)

    wmat = jnp.zeros((total, LANE), jnp.float32)
    w1 = jnp.concatenate([p["g1_wl"], p["g1_wr"], p["res1_w"]], axis=1)      # (Fin, 3C)
    w2 = jnp.concatenate([p["g2_wl"], p["g2_wr"]], axis=1)                   # (C, 2C)
    wmat = wmat.at[offs["w1"]:offs["w1"] + in_channels, :3 * c].set(w1)
    wmat = wmat.at[offs["w2"]:offs["w2"] + c, :2 * c].set(w2)
    wmat = wmat.at[offs["f1"]:offs["f1"] + c, :hidden_channels].set(p["fc1_w"])
    wmat = wmat.at[offs["f2"]:offs["f2"] + hidden_channels, :32].set(p["fc2_w"])
    wmat = wmat.at[offs["f3"]:offs["f3"] + 32, :out_channels].set(p["fc3_w"])

    vec = jnp.zeros((7, LANE), jnp.float32)
    b1 = jnp.concatenate([p["g1_bl"], p["g1_br"], p["res1_b"]], axis=1)
    b2 = jnp.concatenate([p["g2_bl"], p["g2_br"]], axis=1)
    vec = vec.at[0, :3 * c].set(b1[0])
    vec = vec.at[1, :2 * c].set(b2[0])
    vec = vec.at[2, :c].set(p["g1_bo"][0])
    vec = vec.at[3, :c].set(p["g2_bo"][0])
    vec = vec.at[4, :hidden_channels].set(p["fc1_b"][0])
    vec = vec.at[5, :32].set(p["fc2_b"][0])
    vec = vec.at[6, :out_channels].set(p["fc3_b"][0])

    # Selector constants for the lane-dense (N, N*C) attention layout.
    tile_c = jnp.tile(jnp.eye(c, dtype=jnp.float32), (1, n))                 # (C, N*C)
    mask_j = jnp.repeat(jnp.eye(n, dtype=jnp.float32), c, axis=1)            # (N, N*C)
    we1_t = jnp.tile(p["g1_we"].reshape(1, c), (1, n))
    we2_t = jnp.tile(p["g2_we"].reshape(1, c), (1, n))
    att1_t = jnp.tile(p["g1_att"].reshape(1, c), (1, n))
    att2_t = jnp.tile(p["g2_att"].reshape(1, c), (1, n))
    const = jnp.concatenate([tile_c, mask_j, we1_t, we2_t, att1_t, att2_t], axis=0)

    return {"wmat": wmat, "vec": vec, "const": const}


# ----------------------------------------------------------------------------
# Scatter-free graph densification (one-hot matmuls).  Matches PyG
# add_self_loops(fill_value='mean'): self-loop attr = mean of incoming edge
# attrs per target node (0 if no in-edges).  Assumes unique directed edges
# without pre-existing self loops (as in the test graph).
# ----------------------------------------------------------------------------
def build_graph_dense(edge_index, edge_attr, num_nodes):
    if edge_attr.ndim > 1:
        edge_attr = edge_attr[:, 0]
    src, dst = edge_index[0], edge_index[1]
    src_oh = jax.nn.one_hot(src, num_nodes, dtype=jnp.float32)               # (E, N)
    dst_oh = jax.nn.one_hot(dst, num_nodes, dtype=jnp.float32)               # (E, N)
    adj = jnp.einsum("ed,es->ds", dst_oh, src_oh)                            # (N, N)
    ead = jnp.einsum("ed,es->ds", dst_oh, src_oh * edge_attr[:, None])       # (N, N)
    deg = jnp.sum(adj, axis=1)
    loop_fill = jnp.where(deg > 0, jnp.sum(ead, axis=1) / jnp.maximum(deg, 1.0), 0.0)
    eye = jnp.eye(num_nodes, dtype=jnp.float32)
    adj = adj + eye
    ead = ead + eye * loop_fill[:, None]
    bias = jnp.where(adj > 0, 0.0, -1e30).astype(jnp.float32)
    return ead, bias


@functools.partial(jax.jit, static_argnames=("num_nodes", "out_channels", "heads"))
def gat_localization_forward(kparams, x, edge_index, edge_attr, num_nodes, out_channels, heads=1):
    ead, bias = build_graph_dense(edge_index, edge_attr, num_nodes)
    graph = jnp.concatenate([ead, bias], axis=1)                             # (N, 2N)
    out_padded = fused_forward(x, graph, kparams, heads)                     # (N, 128)
    return out_padded[:, :out_channels]


# ----------------------------------------------------------------------------
# Pure-JAX reference (straightforward (N,N,C) formulation) for a sanity check.
# ----------------------------------------------------------------------------
def reference_forward(p, x, ead, bias):
    def gat(xin, wl, bl, wr, br, we, att, bo):
        xl = xin @ wl + bl
        xr = xin @ wr + br
        pre = xr[:, None, :] + xl[None, :, :] + ead[:, :, None] * we.reshape(1, 1, -1)
        e = jnp.where(pre > 0, pre, 0.2 * pre)
        score = jnp.einsum("ijc,c->ij", e, att.reshape(-1)) + bias
        alpha = jax.nn.softmax(score, axis=1)
        return alpha @ xl + bo

    a1 = gat(x, p["g1_wl"], p["g1_bl"], p["g1_wr"], p["g1_br"], p["g1_we"], p["g1_att"], p["g1_bo"])
    h1 = jax.nn.elu(a1 + (x @ p["res1_w"] + p["res1_b"]))
    a2 = gat(h1, p["g2_wl"], p["g2_bl"], p["g2_wr"], p["g2_br"], p["g2_we"], p["g2_att"], p["g2_bo"])
    h2 = jax.nn.elu(a2 + h1)
    f = jnp.maximum(h2 @ p["fc1_w"] + p["fc1_b"], 0.0)
    f = jnp.maximum(f @ p["fc2_w"] + p["fc2_b"], 0.0)
    return f @ p["fc3_w"] + p["fc3_b"]


if __name__ == "__main__":
    N = 16        # graph nodes
    IN_CH = 8     # in_channels
    HID = 32      # hidden_channels
    OUT_CH = 2    # out_channels
    HEADS = 1

    key = jax.random.PRNGKey(0)
    k_param, k_x, k_ea = jax.random.split(key, 3)

    raw_params = init_params(k_param, IN_CH, HID, OUT_CH, HEADS)
    kparams = pack_params(raw_params, N, IN_CH, HID, OUT_CH, HEADS)

    x = jax.random.normal(k_x, (N, IN_CH), jnp.float32)

    # deterministic directed edge list (unique edges, no self loops)
    src_list, dst_list = [], []
    for i in range(N):
        for off in (1, 2, 5):
            src_list.append(i)
            dst_list.append((i + off) % N)
    edge_index = jnp.array([src_list, dst_list], dtype=jnp.int32)            # (2, 48)
    edge_attr = jax.random.uniform(k_ea, (edge_index.shape[1],), jnp.float32,
                                   minval=0.1, maxval=2.0)                   # (48,)

    out = gat_localization_forward(kparams, x, edge_index, edge_attr,
                                   num_nodes=N, out_channels=OUT_CH, heads=HEADS)
    out = jax.block_until_ready(out)

    ead, bias = build_graph_dense(edge_index, edge_attr, N)
    ref = reference_forward(raw_params, x, ead, bias)

    assert out.shape == (N, OUT_CH) and out.dtype == jnp.float32
    assert bool(jnp.all(jnp.isfinite(out)))
    assert bool(jnp.allclose(out, ref, atol=1e-3, rtol=1e-3))
    print("KERNEL_OK")
</pallas_src>

<mosaic_0001>
module attributes {stable_mosaic.version = 11 : i64} {
  func.func @fused_gat_kernel(%arg0: memref<16x8xf32, #tpu.memory_space<vmem>>, %arg1: memref<16x32xf32, #tpu.memory_space<vmem>>, %arg2: memref<52x512xf32, #tpu.memory_space<vmem>>, %arg3: memref<136x128xf32, #tpu.memory_space<vmem>>, %arg4: memref<7x128xf32, #tpu.memory_space<vmem>>, %arg5: memref<16x128xf32, #tpu.memory_space<vmem>>) attributes {dimension_semantics = [], scalar_prefetch = 0 : i64, scratch_operands = 0 : i64, tpu.core_type = #tpu.core_type<tc>} {
    %c0 = arith.constant 0 : index
    %c0_0 = arith.constant 0 : index
    %0 = vector.load %arg0[%c0, %c0_0] : memref<16x8xf32, #tpu.memory_space<vmem>>, vector<16x8xf32>
    %c0_1 = arith.constant 0 : index
    %c0_2 = arith.constant 0 : index
    %1 = vector.load %arg1[%c0_1, %c0_2] : memref<16x32xf32, #tpu.memory_space<vmem>>, vector<16x32xf32>
    %2 = vector.extract_strided_slice %1 {offsets = [0, 0], sizes = [16, 16], strides = [1, 1]} : vector<16x32xf32> to vector<16x16xf32>
    %3 = vector.extract_strided_slice %1 {offsets = [0, 16], sizes = [16, 16], strides = [1, 1]} : vector<16x32xf32> to vector<16x16xf32>
    %c0_3 = arith.constant 0 : index
    %c0_4 = arith.constant 0 : index
    %4 = vector.load %arg2[%c0_3, %c0_4] : memref<52x512xf32, #tpu.memory_space<vmem>>, vector<32x512xf32>
    %c32 = arith.constant 32 : index
    %c0_5 = arith.constant 0 : index
    %5 = vector.load %arg2[%c32, %c0_5] : memref<52x512xf32, #tpu.memory_space<vmem>>, vector<16x512xf32>
    %c48 = arith.constant 48 : index
    %c0_6 = arith.constant 0 : index
    %6 = vector.load %arg2[%c48, %c0_6] : memref<52x512xf32, #tpu.memory_space<vmem>>, vector<4x512xf32>
    %7 = vector.extract_strided_slice %6 {offsets = [0, 0], sizes = [1, 512], strides = [1, 1]} : vector<4x512xf32> to vector<1x512xf32>
    %8 = vector.extract_strided_slice %6 {offsets = [1, 0], sizes = [1, 512], strides = [1, 1]} : vector<4x512xf32> to vector<1x512xf32>
    %9 = vector.extract_strided_slice %6 {offsets = [2, 0], sizes = [1, 512], strides = [1, 1]} : vector<4x512xf32> to vector<1x512xf32>
    %10 = vector.extract_strided_slice %6 {offsets = [3, 0], sizes = [1, 512], strides = [1, 1]} : vector<4x512xf32> to vector<1x512xf32>
    %c0_7 = arith.constant 0 : index
    %c0_8 = arith.constant 0 : index
    %11 = vector.load %arg4[%c0_7, %c0_8] : memref<7x128xf32, #tpu.memory_space<vmem>>, vector<7x128xf32>
    %12 = vector.extract_strided_slice %11 {offsets = [0, 0], sizes = [1, 96], strides = [1, 1]} : vector<7x128xf32> to vector<1x96xf32>
    %13 = vector.extract_strided_slice %11 {offsets = [1, 0], sizes = [1, 64], strides = [1, 1]} : vector<7x128xf32> to vector<1x64xf32>
    %14 = vector.extract_strided_slice %11 {offsets = [2, 0], sizes = [1, 32], strides = [1, 1]} : vector<7x128xf32> to vector<1x32xf32>
    %15 = vector.extract_strided_slice %11 {offsets = [3, 0], sizes = [1, 32], strides = [1, 1]} : vector<7x128xf32> to vector<1x32xf32>
    %16 = vector.extract_strided_slice %11 {offsets = [4, 0], sizes = [1, 32], strides = [1, 1]} : vector<7x128xf32> to vector<1x32xf32>
    %17 = vector.extract_strided_slice %11 {offsets = [5, 0], sizes = [1, 32], strides = [1, 1]} : vector<7x128xf32> to vector<1x32xf32>
    %18 = vector.extract_strided_slice %11 {offsets = [6, 0], sizes = [1, 128], strides = [1, 1]} : vector<7x128xf32> to vector<1x128xf32>
    %c0_9 = arith.constant 0 : index
    %c0_10 = arith.constant 0 : index
    %19 = vector.load %arg3[%c0_9, %c0_10] : memref<136x128xf32, #tpu.memory_space<vmem>>, vector<8x96xf32>
    %c8 = arith.constant 8 : index
    %c0_11 = arith.constant 0 : index
    %20 = vector.load %arg3[%c8, %c0_11] : memref<136x128xf32, #tpu.memory_space<vmem>>, vector<32x64xf32>
    %c40 = arith.constant 40 : index
    %c0_12 = arith.constant 0 : index
    %21 = vector.load %arg3[%c40, %c0_12] : memref<136x128xf32, #tpu.memory_space<vmem>>, vector<32x32xf32>
    %c72 = arith.constant 72 : index
    %c0_13 = arith.constant 0 : index
    %22 = vector.load %arg3[%c72, %c0_13] : memref<136x128xf32, #tpu.memory_space<vmem>>, vector<32x32xf32>
    %c104 = arith.constant 104 : index
    %c0_14 = arith.constant 0 : index
    %23 = vector.load %arg3[%c104, %c0_14] : memref<136x128xf32, #tpu.memory_space<vmem>>, vector<32x128xf32>
    %cst = arith.constant dense<0.000000e+00> : vector<16x96xf32>
    %24 = tpu.matmul %0, %19, %cst {dimension_numbers = #tpu.dot_dimension_numbers<[1], [0], [0], [1], [0, 0, 1, 1], [], []>} : vector<16x8xf32>, vector<8x96xf32>, vector<16x96xf32> -> vector<16x96xf32>
    %25 = vector.broadcast %12 : vector<1x96xf32> to vector<16x96xf32>
    %26 = arith.addf %24, %25 : vector<16x96xf32>
    %27 = vector.extract_strided_slice %26 {offsets = [0, 0], sizes = [16, 32], strides = [1, 1]} : vector<16x96xf32> to vector<16x32xf32>
    %28 = vector.extract_strided_slice %26 {offsets = [0, 32], sizes = [16, 32], strides = [1, 1]} : vector<16x96xf32> to vector<16x32xf32>
    %29 = vector.extract_strided_slice %26 {offsets = [0, 64], sizes = [16, 32], strides = [1, 1]} : vector<16x96xf32> to vector<16x32xf32>
    %cst_15 = arith.constant dense<0.000000e+00> : vector<16x512xf32>
    %30 = tpu.matmul %28, %4, %cst_15 {dimension_numbers = #tpu.dot_dimension_numbers<[1], [0], [0], [1], [0, 0, 1, 1], [], []>} : vector<16x32xf32>, vector<32x512xf32>, vector<16x512xf32> -> vector<16x512xf32>
    %cst_16 = arith.constant dense<0.000000e+00> : vector<16x512xf32>
    %31 = tpu.matmul %27, %4, %cst_16 {dimension_numbers = #tpu.dot_dimension_numbers<[1], [0], [0], [1], [0, 0, 1, 1], [], []>} : vector<16x32xf32>, vector<32x512xf32>, vector<16x512xf32> -> vector<16x512xf32>
    %32 = arith.mulf %31, %5 : vector<16x512xf32>
    %cst_17 = arith.constant dense<0.000000e+00> : vector<512xf32>
    %33 = vector.multi_reduction <add>, %32, %cst_17 [0] : vector<16x512xf32> to vector<512xf32>
    %34 = vector.shape_cast %33 : vector<512xf32> to vector<1x512xf32>
    %cst_18 = arith.constant dense<0.000000e+00> : vector<16x512xf32>
    %35 = tpu.matmul %2, %5, %cst_18 {dimension_numbers = #tpu.dot_dimension_numbers<[1], [0], [0], [1], [0, 0, 1, 1], [], []>} : vector<16x16xf32>, vector<16x512xf32>, vector<16x512xf32> -> vector<16x512xf32>
    %36 = vector.broadcast %7 : vector<1x512xf32> to vector<16x512xf32>
    %37 = arith.mulf %35, %36 : vector<16x512xf32>
    %38 = vector.broadcast %34 : vector<1x512xf32> to vector<16x512xf32>
    %39 = arith.addf %30, %38 : vector<16x512xf32>
    %40 = arith.addf %39, %37 : vector<16x512xf32>
    %cst_19 = arith.constant 0.000000e+00 : f32
    %41 = vector.broadcast %cst_19 : f32 to vector<16x512xf32>
    %42 = arith.cmpf ogt, %40, %41 : vector<16x512xf32>
    %cst_20 = arith.constant 2.000000e-01 : f32
    %43 = vector.broadcast %cst_20 : f32 to vector<16x512xf32>
    %44 = arith.mulf %43, %40 : vector<16x512xf32>
    %45 = arith.select %42, %40, %44 : vector<16x512xi1>, vector<16x512xf32>
    %46 = vector.broadcast %9 : vector<1x512xf32> to vector<16x512xf32>
    %47 = arith.mulf %45, %46 : vector<16x512xf32>
    %cst_21 = arith.constant dense<0.000000e+00> : vector<16x16xf32>
    %48 = tpu.matmul %47, %5, %cst_21 {dimension_numbers = #tpu.dot_dimension_numbers<[1], [1], [0], [0], [0, 0, 1, 0], [], []>} : vector<16x512xf32>, vector<16x512xf32>, vector<16x16xf32> -> vector<16x16xf32>
    %49 = arith.addf %48, %3 : vector<16x16xf32>
    %cst_22 = arith.constant dense<0xFF800000> : vector<16xf32>
    %50 = vector.multi_reduction <maximumf>, %49, %cst_22 [1] : vector<16x16xf32> to vector<16xf32>
    %51 = vector.shape_cast %50 : vector<16xf32> to vector<16x1xf32>
    %52 = vector.broadcast %51 : vector<16x1xf32> to vector<16x16xf32>
    %53 = arith.subf %49, %52 : vector<16x16xf32>
    %54 = math.exp %53 : vector<16x16xf32>
    %cst_23 = arith.constant dense<0.000000e+00> : vector<16xf32>
    %55 = vector.multi_reduction <add>, %54, %cst_23 [1] : vector<16x16xf32> to vector<16xf32>
    %56 = vector.shape_cast %55 : vector<16xf32> to vector<16x1xf32>
    %57 = tpu.reciprocal %56 : vector<16x1xf32> -> vector<16x1xf32>
    %58 = vector.broadcast %57 : vector<16x1xf32> to vector<16x16xf32>
    %59 = arith.mulf %54, %58 : vector<16x16xf32>
    %cst_24 = arith.constant dense<0.000000e+00> : vector<16x32xf32>
    %60 = tpu.matmul %59, %27, %cst_24 {dimension_numbers = #tpu.dot_dimension_numbers<[1], [0], [0], [1], [0, 0, 1, 1], [], []>} : vector<16x16xf32>, vector<16x32xf32>, vector<16x32xf32> -> vector<16x32xf32>
    %61 = vector.broadcast %14 : vector<1x32xf32> to vector<16x32xf32>
    %62 = arith.addf %60, %61 : vector<16x32xf32>
    %63 = arith.addf %62, %29 : vector<16x32xf32>
    %cst_25 = arith.constant 0.000000e+00 : f32
    %64 = vector.broadcast %cst_25 : f32 to vector<16x32xf32>
    %65 = arith.cmpf ogt, %63, %64 : vector<16x32xf32>
    %cst_26 = arith.constant 0.000000e+00 : f32
    %66 = vector.broadcast %cst_26 : f32 to vector<16x32xf32>
    %67 = arith.minimumf %63, %66 : vector<16x32xf32>
    %68 = math.exp %67 : vector<16x32xf32>
    %cst_27 = arith.constant 1.000000e+00 : f32
    %69 = vector.broadcast %cst_27 : f32 to vector<16x32xf32>
    %70 = arith.subf %68, %69 : vector<16x32xf32>
    %71 = arith.select %65, %63, %70 : vector<16x32xi1>, vector<16x32xf32>
    %cst_28 = arith.constant dense<0.000000e+00> : vector<16x64xf32>
    %72 = tpu.matmul %71, %20, %cst_28 {dimension_numbers = #tpu.dot_dimension_numbers<[1], [0], [0], [1], [0, 0, 1, 1], [], []>} : vector<16x32xf32>, vector<32x64xf32>, vector<16x64xf32> -> vector<16x64xf32>
    %73 = vector.broadcast %13 : vector<1x64xf32> to vector<16x64xf32>
    %74 = arith.addf %72, %73 : vector<16x64xf32>
    %75 = vector.extract_strided_slice %74 {offsets = [0, 0], sizes = [16, 32], strides = [1, 1]} : vector<16x64xf32> to vector<16x32xf32>
    %76 = vector.extract_strided_slice %74 {offsets = [0, 32], sizes = [16, 32], strides = [1, 1]} : vector<16x64xf32> to vector<16x32xf32>
    %cst_29 = arith.constant dense<0.000000e+00> : vector<16x512xf32>
    %77 = tpu.matmul %76, %4, %cst_29 {dimension_numbers = #tpu.dot_dimension_numbers<[1], [0], [0], [1], [0, 0, 1, 1], [], []>} : vector<16x32xf32>, vector<32x512xf32>, vector<16x512xf32> -> vector<16x512xf32>
    %cst_30 = arith.constant dense<0.000000e+00> : vector<16x512xf32>
    %78 = tpu.matmul %75, %4, %cst_30 {dimension_numbers = #tpu.dot_dimension_numbers<[1], [0], [0], [1], [0, 0, 1, 1], [], []>} : vector<16x32xf32>, vector<32x512xf32>, vector<16x512xf32> -> vector<16x512xf32>
    %79 = arith.mulf %78, %5 : vector<16x512xf32>
    %cst_31 = arith.constant dense<0.000000e+00> : vector<512xf32>
    %80 = vector.multi_reduction <add>, %79, %cst_31 [0] : vector<16x512xf32> to vector<512xf32>
    %81 = vector.shape_cast %80 : vector<512xf32> to vector<1x512xf32>
    %cst_32 = arith.constant dense<0.000000e+00> : vector<16x512xf32>
    %82 = tpu.matmul %2, %5, %cst_32 {dimension_numbers = #tpu.dot_dimension_numbers<[1], [0], [0], [1], [0, 0, 1, 1], [], []>} : vector<16x16xf32>, vector<16x512xf32>, vector<16x512xf32> -> vector<16x512xf32>
    %83 = vector.broadcast %8 : vector<1x512xf32> to vector<16x512xf32>
    %84 = arith.mulf %82, %83 : vector<16x512xf32>
    %85 = vector.broadcast %81 : vector<1x512xf32> to vector<16x512xf32>
    %86 = arith.addf %77, %85 : vector<16x512xf32>
    %87 = arith.addf %86, %84 : vector<16x512xf32>
    %cst_33 = arith.constant 0.000000e+00 : f32
    %88 = vector.broadcast %cst_33 : f32 to vector<16x512xf32>
    %89 = arith.cmpf ogt, %87, %88 : vector<16x512xf32>
    %cst_34 = arith.constant 2.000000e-01 : f32
    %90 = vector.broadcast %cst_34 : f32 to vector<16x512xf32>
    %91 = arith.mulf %90, %87 : vector<16x512xf32>
    %92 = arith.select %89, %87, %91 : vector<16x512xi1>, vector<16x512xf32>
    %93 = vector.broadcast %10 : vector<1x512xf32> to vector<16x512xf32>
    %94 = arith.mulf %92, %93 : vector<16x512xf32>
    %cst_35 = arith.constant dense<0.000000e+00> : vector<16x16xf32>
    %95 = tpu.matmul %94, %5, %cst_35 {dimension_numbers = #tpu.dot_dimension_numbers<[1], [1], [0], [0], [0, 0, 1, 0], [], []>} : vector<16x512xf32>, vector<16x512xf32>, vector<16x16xf32> -> vector<16x16xf32>
    %96 = arith.addf %95, %3 : vector<16x16xf32>
    %cst_36 = arith.constant dense<0xFF800000> : vector<16xf32>
    %97 = vector.multi_reduction <maximumf>, %96, %cst_36 [1] : vector<16x16xf32> to vector<16xf32>
    %98 = vector.shape_cast %97 : vector<16xf32> to vector<16x1xf32>
    %99 = vector.broadcast %98 : vector<16x1xf32> to vector<16x16xf32>
    %100 = arith.subf %96, %99 : vector<16x16xf32>
    %101 = math.exp %100 : vector<16x16xf32>
    %cst_37 = arith.constant dense<0.000000e+00> : vector<16xf32>
    %102 = vector.multi_reduction <add>, %101, %cst_37 [1] : vector<16x16xf32> to vector<16xf32>
    %103 = vector.shape_cast %102 : vector<16xf32> to vector<16x1xf32>
    %104 = tpu.reciprocal %103 : vector<16x1xf32> -> vector<16x1xf32>
    %105 = vector.broadcast %104 : vector<16x1xf32> to vector<16x16xf32>
    %106 = arith.mulf %101, %105 : vector<16x16xf32>
    %cst_38 = arith.constant dense<0.000000e+00> : vector<16x32xf32>
    %107 = tpu.matmul %106, %75, %cst_38 {dimension_numbers = #tpu.dot_dimension_numbers<[1], [0], [0], [1], [0, 0, 1, 1], [], []>} : vector<16x16xf32>, vector<16x32xf32>, vector<16x32xf32> -> vector<16x32xf32>
    %108 = vector.broadcast %15 : vector<1x32xf32> to vector<16x32xf32>
    %109 = arith.addf %107, %108 : vector<16x32xf32>
    %110 = arith.addf %109, %71 : vector<16x32xf32>
    %cst_39 = arith.constant 0.000000e+00 : f32
    %111 = vector.broadcast %cst_39 : f32 to vector<16x32xf32>
    %112 = arith.cmpf ogt, %110, %111 : vector<16x32xf32>
    %cst_40 = arith.constant 0.000000e+00 : f32
    %113 = vector.broadcast %cst_40 : f32 to vector<16x32xf32>
    %114 = arith.minimumf %110, %113 : vector<16x32xf32>
    %115 = math.exp %114 : vector<16x32xf32>
    %cst_41 = arith.constant 1.000000e+00 : f32
    %116 = vector.broadcast %cst_41 : f32 to vector<16x32xf32>
    %117 = arith.subf %115, %116 : vector<16x32xf32>
    %118 = arith.select %112, %110, %117 : vector<16x32xi1>, vector<16x32xf32>
    %cst_42 = arith.constant dense<0.000000e+00> : vector<16x32xf32>
    %119 = tpu.matmul %118, %21, %cst_42 {dimension_numbers = #tpu.dot_dimension_numbers<[1], [0], [0], [1], [0, 0, 1, 1], [], []>} : vector<16x32xf32>, vector<32x32xf32>, vector<16x32xf32> -> vector<16x32xf32>
    %120 = vector.broadcast %16 : vector<1x32xf32> to vector<16x32xf32>
    %121 = arith.addf %119, %120 : vector<16x32xf32>
    %cst_43 = arith.constant 0.000000e+00 : f32
    %122 = vector.broadcast %cst_43 : f32 to vector<16x32xf32>
    %123 = arith.maximumf %121, %122 : vector<16x32xf32>
    %cst_44 = arith.constant dense<0.000000e+00> : vector<16x32xf32>
    %124 = tpu.matmul %123, %22, %cst_44 {dimension_numbers = #tpu.dot_dimension_numbers<[1], [0], [0], [1], [0, 0, 1, 1], [], []>} : vector<16x32xf32>, vector<32x32xf32>, vector<16x32xf32> -> vector<16x32xf32>
    %125 = vector.broadcast %17 : vector<1x32xf32> to vector<16x32xf32>
    %126 = arith.addf %124, %125 : vector<16x32xf32>
    %cst_45 = arith.constant 0.000000e+00 : f32
    %127 = vector.broadcast %cst_45 : f32 to vector<16x32xf32>
    %128 = arith.maximumf %126, %127 : vector<16x32xf32>
    %cst_46 = arith.constant dense<0.000000e+00> : vector<16x128xf32>
    %129 = tpu.matmul %128, %23, %cst_46 {dimension_numbers = #tpu.dot_dimension_numbers<[1], [0], [0], [1], [0, 0, 1, 1], [], []>} : vector<16x32xf32>, vector<32x128xf32>, vector<16x128xf32> -> vector<16x128xf32>
    %130 = vector.broadcast %18 : vector<1x128xf32> to vector<16x128xf32>
    %131 = arith.addf %129, %130 : vector<16x128xf32>
    %c0_47 = arith.constant 0 : index
    %c0_48 = arith.constant 0 : index
    %132 = vector.load %arg5[%c0_47, %c0_48] : memref<16x128xf32, #tpu.memory_space<vmem>>, vector<16x128xf32>
    tpu.vector_store %arg5[%c0_47, %c0_48], %131 {strides = array<i32>} : memref<16x128xf32, #tpu.memory_space<vmem>>, vector<16x128xf32>,
    return
  }
}

</mosaic_0001>

<llo_original>
// kernel: gat_localization_forward.1
$region0: #{gat_localization_forward.1}
  #allocation0 [shape = 'u32[]', space=smem, size = 0x4, offset = 0x4, fixed_abs, tag = 'smem constant byte address 0x4 - core index']
  #allocation1 [shape = 'u32[72,128]{1,0:T(1,128)}', space=vmem, size = 0x9000, scoped, tag = 'internal scratch']
  %s0 = inlined_call_operand.vmem [shape: f32[16,8], index: 0, kind: input, shape index: {}]
  %s1 = inlined_call_operand.vmem [shape: f32[16,32], index: 1, kind: input, shape index: {}]
  %s2 = inlined_call_operand.hbm [shape: f32[52,512], index: 2, kind: input, shape index: {}]
  %s3 = inlined_call_operand.hbm [shape: f32[136,128], index: 3, kind: input, shape index: {}]
  %s4 = inlined_call_operand.vmem [shape: f32[7,128], index: 4, kind: input, shape index: {}]
  %s5 = inlined_call_operand.vmem [shape: f32[16,128], index: 5, kind: output, shape index: {}]
  %s6 = sld [smem:[#allocation0]]
  $region38: #{gat_localization_forward.1} parent=0
    _
  %s8 = ssub.s32 1, %s6
  %s9 = scalar_select 0, %s8, %s6
  $region1: #{gat_localization_forward.1} parent=0
    #allocation2 [shape = 'u8[114688]{0}', space=vmem, size = 0x1c000, scoped, tag = 'input window, operand 2, single buffered']
    #allocation3 [shape = 's32[1]{0}', space=sflag, size = 0x4, scoped, tag = 'scoped memory for gat_localization_forward.1']
    #allocation4 [shape = 'u8[69632]{0}', space=vmem, size = 0x11000, scoped, tag = 'input window, operand 3, single buffered']
    #allocation5 [shape = 's32[1]{0}', space=sflag, size = 0x4, scoped, tag = 'scoped memory for gat_localization_forward.1']
    %10 = vsyncpa [#allocation3], 0
    %11 = vsyncpa [#allocation5], 0
    // Predicated region
    $region2: #{gat_localization_forward.1} parent=1 // pred_check
      _
    $region3: #{gat_localization_forward.1} parent=1 // pred_check_branch
      %13 = sbr.rel (0) target = $region5
    $region4: #{gat_localization_forward.1} parent=1 // pred_region
      _
    $region5: #{gat_localization_forward.1} parent=1 // pred_fallthru
      _
    // Predicated region
    $region6: #{gat_localization_forward.1} parent=1 // pred_check
      _
    $region7: #{gat_localization_forward.1} parent=1 // pred_check_branch
      %15 = sbr.rel (0) target = $region9
    $region8: #{gat_localization_forward.1} parent=1 // pred_region
      _
    $region9: #{gat_localization_forward.1} parent=1 // pred_fallthru
      _
    // Predicated region
    $region10: #{gat_localization_forward.1} parent=1 // pred_check
      _
    $region11: #{gat_localization_forward.1} parent=1 // pred_check_branch
      %17 = sbr.rel (0) target = $region13
    $region12: #{gat_localization_forward.1} parent=1 // pred_region
      %19 = vsyncadd [#allocation3], 0
      %s20 = sshll.u32 %s2, 4
      %s21 = int_to_ptr.hbm [resolvable:$true] %s20
      %s22 = sshll.u32 [#allocation2], 4
      %s23 = int_to_ptr.vmem [resolvable:$true] %s22
      %28 = dma.hbm_to_vmem [thread:$0]  %s21, 3584, %s23, [#allocation3], 512, 512, 32
    $region13: #{gat_localization_forward.1} parent=1 // pred_fallthru
      _
    // Predicated region
    $region14: #{gat_localization_forward.1} parent=1 // pred_check
      _
    $region15: #{gat_localization_forward.1} parent=1 // pred_check_branch
      %30 = sbr.rel (0) target = $region17
    $region16: #{gat_localization_forward.1} parent=1 // pred_region
      %32 = vsyncadd [#allocation5], 0
      %s33 = sshll.u32 %s3, 4
      %s34 = int_to_ptr.hbm [resolvable:$true] %s33
      %s35 = sshll.u32 [#allocation4], 4
      %s36 = int_to_ptr.vmem [resolvable:$true] %s35
      %41 = dma.hbm_to_vmem [thread:$0]  %s34, 2176, %s36, [#allocation5], 128, 128, 8
    $region17: #{gat_localization_forward.1} parent=1 // pred_fallthru
      _
    // Predicated region
    $region18: #{gat_localization_forward.1} parent=1 // pred_check
      _
    $region19: #{gat_localization_forward.1} parent=1 // pred_check_branch
      %43 = sbr.rel (0) target = $region21
    $region20: #{gat_localization_forward.1} parent=1 // pred_region
      _
    $region21: #{gat_localization_forward.1} parent=1 // pred_fallthru
      _
    // Predicated region
    $region22: #{gat_localization_forward.1} parent=1 // pred_check
      _
    $region23: #{gat_localization_forward.1} parent=1 // pred_check_branch
      %45 = sbr.rel (0) target = $region25
    $region24: #{gat_localization_forward.1} parent=1 // pred_region
      %47 = dma.done [#allocation3], 3584
    $region25: #{gat_localization_forward.1} parent=1 // pred_fallthru
      _
    // Predicated region
    $region26: #{gat_localization_forward.1} parent=1 // pred_check
      _
    $region27: #{gat_localization_forward.1} parent=1 // pred_check_branch
      %49 = sbr.rel (0) target = $region29
    $region28: #{gat_localization_forward.1} parent=1 // pred_region
      %51 = dma.done [#allocation5], 2176
    $region29: #{gat_localization_forward.1} parent=1 // pred_fallthru
      _
    %v52 = vld [vmem:[%s0] sm:$0xff]
    %v53 = vld [vmem:[%s0 + $0x8] sm:$0xff]
    %v54 = vld [vmem:[%s1] sm:$0xff]
    %v55 = vld [vmem:[%s1 + $0x8] sm:$0xff]
    %v56 = vld [vmem:[#allocation2] sm:$0xff]
    %v57 = vld [vmem:[#allocation2 + $0x8] sm:$0xff]
    %v58 = vld [vmem:[#allocation2 + $0x10] sm:$0xff]
    %v59 = vld [vmem:[#allocation2 + $0x18] sm:$0xff]
    %v60 = vld [vmem:[#allocation2 + $0x20] sm:$0xff]
    %v61 = vld [vmem:[#allocation2 + $0x28] sm:$0xff]
    %v62 = vld [vmem:[#allocation2 + $0x30] sm:$0xff]
    %v63 = vld [vmem:[#allocation2 + $0x38] sm:$0xff]
    %v64 = vld [vmem:[#allocation2 + $0x40] sm:$0xff]
    %v65 = vld [vmem:[#allocation2 + $0x48] sm:$0xff]
    %v66 = vld [vmem:[#allocation2 + $0x50] sm:$0xff]
    %v67 = vld [vmem:[#allocation2 + $0x58] sm:$0xff]
    %v68 = vld [vmem:[#allocation2 + $0x60] sm:$0xff]
    %v69 = vld [vmem:[#allocation2 + $0x68] sm:$0xff]
    %v70 = vld [vmem:[#allocation2 + $0x70] sm:$0xff]
    %v71 = vld [vmem:[#allocation2 + $0x78] sm:$0xff]
    %v72 = vld [vmem:[#allocation2 + $0x80] sm:$0xff]
    %v73 = vld [vmem:[#allocation2 + $0x88] sm:$0xff]
    %v74 = vld [vmem:[#allocation2 + $0x90] sm:$0xff]
    %v75 = vld [vmem:[#allocation2 + $0x98] sm:$0xff]
    %v76 = vld [vmem:[#allocation2 + $0xa0] sm:$0xff]
    %v77 = vld [vmem:[#allocation2 + $0xa8] sm:$0xff]
    %v78 = vld [vmem:[#allocation2 + $0xb0] sm:$0xff]
    %v79 = vld [vmem:[#allocation2 + $0xb8] sm:$0xff]
    %v80 = vld [vmem:[#allocation2 + $0xc0] sm:$0xf]
    %v81 = vld [vmem:[#allocation2 + $0xc8] sm:$0xf]
    %v82 = vld [vmem:[#allocation2 + $0xd0] sm:$0xf]
    %v83 = vld [vmem:[#allocation2 + $0xd8] sm:$0xf]
    %v84 = vld [vmem:[%s4] sm:$0x7f]
    %v85 = vld [vmem:[#allocation4] sm:$0xff]
    %v86 = vld [vmem:[#allocation4 + $0x8] sm:$0xff]
    %v87 = vld [vmem:[#allocation4 + $0x10] sm:$0xff]
    %v88 = vld [vmem:[#allocation4 + $0x18] sm:$0xff]
    %v89 = vld [vmem:[#allocation4 + $0x20] sm:$0xff]
    %v90 = vld [vmem:[#allocation4 + $0x28] sm:$0xff]
    %v91 = vld [vmem:[#allocation4 + $0x30] sm:$0xff]
    %v92 = vld [vmem:[#allocation4 + $0x38] sm:$0xff]
    %v93 = vld [vmem:[#allocation4 + $0x40] sm:$0xff]
    %v94 = vld [vmem:[#allocation4 + $0x48] sm:$0xff]
    %v95 = vld [vmem:[#allocation4 + $0x50] sm:$0xff]
    %v96 = vld [vmem:[#allocation4 + $0x58] sm:$0xff]
    %v97 = vld [vmem:[#allocation4 + $0x60] sm:$0xff]
    %v98 = vld [vmem:[#allocation4 + $0x68] sm:$0xff]
    %v99 = vld [vmem:[#allocation4 + $0x70] sm:$0xff]
    %v100 = vld [vmem:[#allocation4 + $0x78] sm:$0xff]
    %v101 = vld [vmem:[#allocation4 + $0x80] sm:$0xff]
    %v102 = vperm.slane %v84, 0
    %vm103 = vcmask 64512
    %v105 = vsel %vm103, %v52, 0
    %v108 = vsel %vm103, %v53, 0
    %110 = vmatpush.msra.mxu0 0.0
    %111 = vmatpush.msra.mxu0 0.0
    %112 = vmatpush.msra.mxu0 0.0
    %113 = vmatpush.msra.mxu0 0.0
    %114 = vmatpush.msra.mxu0 0.0
    %115 = vmatpush.msra.mxu0 0.0
    %116 = vmatpush.msra.mxu0 0.0
    %117 = vmatpush.msra.mxu0 0.0
    %118 = vmatpush.msra.mxu0 0.0
    %119 = vmatpush.msra.mxu0 0.0
    %120 = vmatpush.msra.mxu0 0.0
    %121 = vmatpush.msra.mxu0 0.0
    %122 = vmatpush.msra.mxu0 0.0
    %123 = vmatpush.msra.mxu0 0.0
    %124 = vmatpush.msra.mxu0 0.0
    %125 = vmatpush.msra.mxu0 %v85
    %126 = vmatmul.f32.gmra.mxu0 %v105
    %v127 = vpop.f32.mrf.mxu0
    %v128 = vadd.f32 %v102, %v127
    %129 = vmatmul.f32.gmra.mxu0 %v108
    %v130 = vpop.f32.mrf.mxu0
    %v131 = vadd.f32 %v102, %v130
    %132 = vdwg.mxu0
    %vm133 = vcmask 261120
    %v135 = vsel %vm133, %v128, 0
    %v138 = vsel %vm133, %v131, 0
    %140 = vmatpush.msra.mxu0 0.0
    %141 = vmatpush.msra.mxu0 0.0
    %142 = vmatpush.msra.mxu0 0.0
    %143 = vmatpush.msra.mxu0 0.0
    %144 = vmatpush.msra.mxu0 0.0
    %145 = vmatpush.msra.mxu0 0.0
    %146 = vmatpush.msra.mxu0 0.0
    %147 = vmatpush.msra.mxu0 0.0
    %148 = vmatpush.msra.mxu0 0.0
    %149 = vmatpush.msra.mxu0 0.0
    %150 = vmatpush.msra.mxu0 0.0
    %151 = vmatpush.msra.mxu0 0.0
    %152 = vmatpush.msra.mxu0 %v68
    %153 = vmatpush.msra.mxu0 %v64
    %154 = vmatpush.msra.mxu0 %v60
    %155 = vmatpush.msra.mxu0 %v56
    %156 = vmatmul.f32.gmra.mxu0 %v135
    %v157 = vpop.f32.mrf.mxu0
    %v158 = vadd.f32 0.0, %v157
    %159 = vmatmul.f32.gmra.mxu0 %v138
    %v160 = vpop.f32.mrf.mxu0
    %v161 = vadd.f32 0.0, %v160
    %162 = vdwg.mxu0
    %163 = vmatpush.msra.mxu0 0.0
    %164 = vmatpush.msra.mxu0 0.0
    %165 = vmatpush.msra.mxu0 0.0
    %166 = vmatpush.msra.mxu0 0.0
    %167 = vmatpush.msra.mxu0 0.0
    %168 = vmatpush.msra.mxu0 0.0
    %169 = vmatpush.msra.mxu0 0.0
    %170 = vmatpush.msra.mxu0 0.0
    %171 = vmatpush.msra.mxu0 0.0
    %172 = vmatpush.msra.mxu0 0.0
    %173 = vmatpush.msra.mxu0 0.0
    %174 = vmatpush.msra.mxu0 0.0
    %175 = vmatpush.msra.mxu0 %v69
    %176 = vmatpush.msra.mxu0 %v65
    %177 = vmatpush.msra.mxu0 %v61
    %178 = vmatpush.msra.mxu0 %v57
    %179 = vmatmul.f32.gmra.mxu0 %v135
    %v180 = vpop.f32.mrf.mxu0
    %v181 = vadd.f32 0.0, %v180
    %182 = vmatmul.f32.gmra.mxu0 %v138
    %v183 = vpop.f32.mrf.mxu0
    %v184 = vadd.f32 0.0, %v183
    %185 = vdwg.mxu0
    %186 = vmatpush.msra.mxu0 0.0
    %187 = vmatpush.msra.mxu0 0.0
    %188 = vmatpush.msra.mxu0 0.0
    %189 = vmatpush.msra.mxu0 0.0
    %190 = vmatpush.msra.mxu0 0.0
    %191 = vmatpush.msra.mxu0 0.0
    %192 = vmatpush.msra.mxu0 0.0
    %193 = vmatpush.msra.mxu0 0.0
    %194 = vmatpush.msra.mxu0 0.0
    %195 = vmatpush.msra.mxu0 0.0
    %196 = vmatpush.msra.mxu0 0.0
    %197 = vmatpush.msra.mxu0 0.0
    %198 = vmatpush.msra.mxu0 %v70
    %199 = vmatpush.msra.mxu0 %v66
    %200 = vmatpush.msra.mxu0 %v62
    %201 = vmatpush.msra.mxu0 %v58
    %202 = vmatmul.f32.gmra.mxu0 %v135
    %v203 = vpop.f32.mrf.mxu0
    %v204 = vadd.f32 0.0, %v203
    %205 = vmatmul.f32.gmra.mxu0 %v138
    %v206 = vpop.f32.mrf.mxu0
    %v207 = vadd.f32 0.0, %v206
    %208 = vdwg.mxu0
    %209 = vmatpush.msra.mxu0 0.0
    %210 = vmatpush.msra.mxu0 0.0
    %211 = vmatpush.msra.mxu0 0.0
    %212 = vmatpush.msra.mxu0 0.0
    %213 = vmatpush.msra.mxu0 0.0
    %214 = vmatpush.msra.mxu0 0.0
    %215 = vmatpush.msra.mxu0 0.0
    %216 = vmatpush.msra.mxu0 0.0
    %217 = vmatpush.msra.mxu0 0.0
    %218 = vmatpush.msra.mxu0 0.0
    %219 = vmatpush.msra.mxu0 0.0
    %220 = vmatpush.msra.mxu0 0.0
    %221 = vmatpush.msra.mxu0 %v71
    %222 = vmatpush.msra.mxu0 %v67
    %223 = vmatpush.msra.mxu0 %v63
    %224 = vmatpush.msra.mxu0 %v59
    %225 = vmatmul.f32.gmra.mxu0 %v135
    %v226 = vpop.f32.mrf.mxu0
    %v227 = vadd.f32 0.0, %v226
    %228 = vmatmul.f32.gmra.mxu0 %v138
    %v229 = vpop.f32.mrf.mxu0
    %v230 = vadd.f32 0.0, %v229
    %231 = vdwg.mxu0
    %v232 = vmul.f32 %v158, %v72
    %v233 = vmul.f32 %v181, %v73
    %v234 = vmul.f32 %v204, %v74
    %v235 = vmul.f32 %v227, %v75
    %v236 = vmul.f32 %v161, %v76
    %v237 = vmul.f32 %v184, %v77
    %v238 = vmul.f32 %v207, %v78
    %v239 = vmul.f32 %v230, %v79
    %v240 = vadd.f32 %v232, %v236
    %v241 = vrot.slane %v240, 4
    %v242 = vadd.f32 %v240, %v241
    %v243 = vrot.slane %v242, 2
    %v244 = vadd.f32 %v242, %v243
    %v245 = vrot.slane %v244, 1
    %v246 = vadd.f32 %v244, %v245
    %v247 = vadd.f32 %v233, %v237
    %v248 = vrot.slane %v247, 4
    %v249 = vadd.f32 %v247, %v248
    %v250 = vrot.slane %v249, 2
    %v251 = vadd.f32 %v249, %v250
    %v252 = vrot.slane %v251, 1
    %v253 = vadd.f32 %v251, %v252
    %v254 = vadd.f32 %v234, %v238
    %v255 = vrot.slane %v254, 4
    %v256 = vadd.f32 %v254, %v255
    %v257 = vrot.slane %v256, 2
    %v258 = vadd.f32 %v256, %v257
    %v259 = vrot.slane %v258, 1
    %v260 = vadd.f32 %v258, %v259
    %v261 = vadd.f32 %v235, %v239
    %v262 = vrot.slane %v261, 4
    %v263 = vadd.f32 %v261, %v262
    %v264 = vrot.slane %v263, 2
    %v265 = vadd.f32 %v263, %v264
    %v266 = vrot.slane %v265, 1
    %v267 = vadd.f32 %v265, %v266
    %vm268 = vcmask 130048
    %v270 = vsel %vm268, %v54, 0
    %v273 = vsel %vm268, %v55, 0
    %275 = vmatpush.msra.mxu0 0.0
    %276 = vmatpush.msra.mxu0 0.0
    %277 = vmatpush.msra.mxu0 0.0
    %278 = vmatpush.msra.mxu0 0.0
    %279 = vmatpush.msra.mxu0 0.0
    %280 = vmatpush.msra.mxu0 0.0
    %281 = vmatpush.msra.mxu0 0.0
    %282 = vmatpush.msra.mxu0 0.0
    %283 = vmatpush.msra.mxu0 0.0
    %284 = vmatpush.msra.mxu0 0.0
    %285 = vmatpush.msra.mxu0 0.0
    %286 = vmatpush.msra.mxu0 0.0
    %287 = vmatpush.msra.mxu0 0.0
    %288 = vmatpush.msra.mxu0 0.0
    %289 = vmatpush.msra.mxu0 %v76
    %290 = vmatpush.msra.mxu0 %v72
    %291 = vmatmul.f32.gmra.mxu0 %v270
    %v292 = vpop.f32.mrf.mxu0
    %v293 = vadd.f32 0.0, %v292
    %294 = vmatmul.f32.gmra.mxu0 %v273
    %v295 = vpop.f32.mrf.mxu0
    %v296 = vadd.f32 0.0, %v295
    %297 = vdwg.mxu0
    %298 = vmatpush.msra.mxu0 0.0
    %299 = vmatpush.msra.mxu0 0.0
    %300 = vmatpush.msra.mxu0 0.0
    %301 = vmatpush.msra.mxu0 0.0
    %302 = vmatpush.msra.mxu0 0.0
    %303 = vmatpush.msra.mxu0 0.0
    %304 = vmatpush.msra.mxu0 0.0
    %305 = vmatpush.msra.mxu0 0.0
    %306 = vmatpush.msra.mxu0 0.0
    %307 = vmatpush.msra.mxu0 0.0
    %308 = vmatpush.msra.mxu0 0.0
    %309 = vmatpush.msra.mxu0 0.0
    %310 = vmatpush.msra.mxu0 0.0
    %311 = vmatpush.msra.mxu0 0.0
    %312 = vmatpush.msra.mxu0 %v77
    %313 = vmatpush.msra.mxu0 %v73
    %314 = vmatmul.f32.gmra.mxu0 %v270
    %v315 = vpop.f32.mrf.mxu0
    %v316 = vadd.f32 0.0, %v315
    %317 = vmatmul.f32.gmra.mxu0 %v273
    %v318 = vpop.f32.mrf.mxu0
    %v319 = vadd.f32 0.0, %v318
    %320 = vdwg.mxu0
    %321 = vmatpush.msra.mxu0 0.0
    %322 = vmatpush.msra.mxu0 0.0
    %323 = vmatpush.msra.mxu0 0.0
    %324 = vmatpush.msra.mxu0 0.0
    %325 = vmatpush.msra.mxu0 0.0
    %326 = vmatpush.msra.mxu0 0.0
    %327 = vmatpush.msra.mxu0 0.0
    %328 = vmatpush.msra.mxu0 0.0
    %329 = vmatpush.msra.mxu0 0.0
    %330 = vmatpush.msra.mxu0 0.0
    %331 = vmatpush.msra.mxu0 0.0
    %332 = vmatpush.msra.mxu0 0.0
    %333 = vmatpush.msra.mxu0 0.0
    %334 = vmatpush.msra.mxu0 0.0
    %335 = vmatpush.msra.mxu0 %v78
    %336 = vmatpush.msra.mxu0 %v74
    %337 = vmatmul.f32.gmra.mxu0 %v270
    %v338 = vpop.f32.mrf.mxu0
    %v339 = vadd.f32 0.0, %v338
    %340 = vmatmul.f32.gmra.mxu0 %v273
    %v341 = vpop.f32.mrf.mxu0
    %v342 = vadd.f32 0.0, %v341
    %343 = vdwg.mxu0
    %344 = vmatpush.msra.mxu0 0.0
    %345 = vmatpush.msra.mxu0 0.0
    %346 = vmatpush.msra.mxu0 0.0
    %347 = vmatpush.msra.mxu0 0.0
    %348 = vmatpush.msra.mxu0 0.0
    %349 = vmatpush.msra.mxu0 0.0
    %350 = vmatpush.msra.mxu0 0.0
    %351 = vmatpush.msra.mxu0 0.0
    %352 = vmatpush.msra.mxu0 0.0
    %353 = vmatpush.msra.mxu0 0.0
    %354 = vmatpush.msra.mxu0 0.0
    %355 = vmatpush.msra.mxu0 0.0
    %356 = vmatpush.msra.mxu0 0.0
    %357 = vmatpush.msra.mxu0 0.0
    %358 = vmatpush.msra.mxu0 %v79
    %359 = vmatpush.msra.mxu0 %v75
    %360 = vmatmul.f32.gmra.mxu0 %v270
    %v361 = vpop.f32.mrf.mxu0
    %v362 = vadd.f32 0.0, %v361
    %363 = vmatmul.f32.gmra.mxu0 %v273
    %v364 = vpop.f32.mrf.mxu0
    %v365 = vadd.f32 0.0, %v364
    %366 = vdwg.mxu0
    %v367 = vperm.slane %v80, 0
    %v368 = vperm.slane %v81, 0
    %v369 = vperm.slane %v82, 0
    %v370 = vperm.slane %v83, 0
    %v371 = vmul.f32 %v293, %v367
    %v372 = vmul.f32 %v316, %v368
    %v373 = vmul.f32 %v339, %v369
    %v374 = vmul.f32 %v362, %v370
    %v375 = vmul.f32 %v296, %v367
    %v376 = vmul.f32 %v319, %v368
    %v377 = vmul.f32 %v342, %v369
    %v378 = vmul.f32 %v365, %v370
    %379 = vrot.lane.b32.xlu0 %v128, 96
    %v380 = vpop.permute.xlu0 %379
    %381 = vrot.lane.b32.xlu0 %v131, 96
    %v382 = vpop.permute.xlu0 %381
    %v383 = vsel %vm133, %v380, 0
    %v385 = vsel %vm133, %v382, 0
    %387 = vmatpush.msra.mxu0 0.0
    %388 = vmatpush.msra.mxu0 0.0
    %389 = vmatpush.msra.mxu0 0.0
    %390 = vmatpush.msra.mxu0 0.0
    %391 = vmatpush.msra.mxu0 0.0
    %392 = vmatpush.msra.mxu0 0.0
    %393 = vmatpush.msra.mxu0 0.0
    %394 = vmatpush.msra.mxu0 0.0
    %395 = vmatpush.msra.mxu0 0.0
    %396 = vmatpush.msra.mxu0 0.0
    %397 = vmatpush.msra.mxu0 0.0
    %398 = vmatpush.msra.mxu0 0.0
    %399 = vmatpush.msra.mxu0 %v68
    %400 = vmatpush.msra.mxu0 %v64
    %401 = vmatpush.msra.mxu0 %v60
    %402 = vmatpush.msra.mxu0 %v56
    %403 = vmatmul.f32.gmra.mxu0 %v383
    %v404 = vpop.f32.mrf.mxu0
    %v405 = vadd.f32 %v246, %v404
    %406 = vmatmul.f32.gmra.mxu0 %v385
    %v407 = vpop.f32.mrf.mxu0
    %v408 = vadd.f32 %v246, %v407
    %409 = vdwg.mxu0
    %410 = vmatpush.msra.mxu0 0.0
    %411 = vmatpush.msra.mxu0 0.0
    %412 = vmatpush.msra.mxu0 0.0
    %413 = vmatpush.msra.mxu0 0.0
    %414 = vmatpush.msra.mxu0 0.0
    %415 = vmatpush.msra.mxu0 0.0
    %416 = vmatpush.msra.mxu0 0.0
    %417 = vmatpush.msra.mxu0 0.0
    %418 = vmatpush.msra.mxu0 0.0
    %419 = vmatpush.msra.mxu0 0.0
    %420 = vmatpush.msra.mxu0 0.0
    %421 = vmatpush.msra.mxu0 0.0
    %422 = vmatpush.msra.mxu0 %v69
    %423 = vmatpush.msra.mxu0 %v65
    %424 = vmatpush.msra.mxu0 %v61
    %425 = vmatpush.msra.mxu0 %v57
    %426 = vmatmul.f32.gmra.mxu0 %v383
    %v427 = vpop.f32.mrf.mxu0
    %v428 = vadd.f32 %v253, %v427
    %429 = vmatmul.f32.gmra.mxu0 %v385
    %v430 = vpop.f32.mrf.mxu0
    %v431 = vadd.f32 %v253, %v430
    %432 = vdwg.mxu0
    %433 = vmatpush.msra.mxu0 0.0
    %434 = vmatpush.msra.mxu0 0.0
    %435 = vmatpush.msra.mxu0 0.0
    %436 = vmatpush.msra.mxu0 0.0
    %437 = vmatpush.msra.mxu0 0.0
    %438 = vmatpush.msra.mxu0 0.0
    %439 = vmatpush.msra.mxu0 0.0
    %440 = vmatpush.msra.mxu0 0.0
    %441 = vmatpush.msra.mxu0 0.0
    %442 = vmatpush.msra.mxu0 0.0
    %443 = vmatpush.msra.mxu0 0.0
    %444 = vmatpush.msra.mxu0 0.0
    %445 = vmatpush.msra.mxu0 %v70
    %446 = vmatpush.msra.mxu0 %v66
    %447 = vmatpush.msra.mxu0 %v62
    %448 = vmatpush.msra.mxu0 %v58
    %449 = vmatmul.f32.gmra.mxu0 %v383
    %v450 = vpop.f32.mrf.mxu0
    %v451 = vadd.f32 %v260, %v450
    %452 = vmatmul.f32.gmra.mxu0 %v385
    %v453 = vpop.f32.mrf.mxu0
    %v454 = vadd.f32 %v260, %v453
    %455 = vdwg.mxu0
    %456 = vmatpush.msra.mxu0 0.0
    %457 = vmatpush.msra.mxu0 0.0
    %458 = vmatpush.msra.mxu0 0.0
    %459 = vmatpush.msra.mxu0 0.0
    %460 = vmatpush.msra.mxu0 0.0
    %461 = vmatpush.msra.mxu0 0.0
    %462 = vmatpush.msra.mxu0 0.0
    %463 = vmatpush.msra.mxu0 0.0
    %464 = vmatpush.msra.mxu0 0.0
    %465 = vmatpush.msra.mxu0 0.0
    %466 = vmatpush.msra.mxu0 0.0
    %467 = vmatpush.msra.mxu0 0.0
    %468 = vmatpush.msra.mxu0 %v71
    %469 = vmatpush.msra.mxu0 %v67
    %470 = vmatpush.msra.mxu0 %v63
    %471 = vmatpush.msra.mxu0 %v59
    %472 = vmatmul.f32.gmra.mxu0 %v383
    %v473 = vpop.f32.mrf.mxu0
    %v474 = vadd.f32 %v267, %v473
    %475 = vmatmul.f32.gmra.mxu0 %v385
    %v476 = vpop.f32.mrf.mxu0
    %v477 = vadd.f32 %v267, %v476
    %478 = vdwg.mxu0
    %v479 = vadd.f32 %v405, %v371
    %v480 = vadd.f32 %v428, %v372
    %v481 = vadd.f32 %v451, %v373
    %v482 = vadd.f32 %v474, %v374
    %v483 = vadd.f32 %v408, %v375
    %v484 = vadd.f32 %v431, %v376
    %v485 = vadd.f32 %v454, %v377
    %v486 = vadd.f32 %v477, %v378
    %vm487 = vcmp.gt.f32.partialorder %v479, 0.0
    %vm488 = vcmp.gt.f32.partialorder %v480, 0.0
    %vm489 = vcmp.gt.f32.partialorder %v481, 0.0
    %vm490 = vcmp.gt.f32.partialorder %v482, 0.0
    %vm491 = vcmp.gt.f32.partialorder %v483, 0.0
    %vm492 = vcmp.gt.f32.partialorder %v484, 0.0
    %vm493 = vcmp.gt.f32.partialorder %v485, 0.0
    %vm494 = vcmp.gt.f32.partialorder %v486, 0.0
    %v495 = vmul.f32 %v479, 0.2
    %v496 = vmul.f32 %v480, 0.2
    %v497 = vmul.f32 %v481, 0.2
    %v498 = vmul.f32 %v482, 0.2
    %v499 = vmul.f32 %v483, 0.2
    %v500 = vmul.f32 %v484, 0.2
    %v501 = vmul.f32 %v485, 0.2
    %v502 = vmul.f32 %v486, 0.2
    %v503 = vsel %vm487, %v479, %v495
    %v504 = vsel %vm488, %v480, %v496
    %v505 = vsel %vm489, %v481, %v497
    %v506 = vsel %vm490, %v482, %v498
    %v507 = vsel %vm491, %v483, %v499
    %v508 = vsel %vm492, %v484, %v500
    %v509 = vsel %vm493, %v485, %v501
    %v510 = vsel %vm494, %v486, %v502
    %v511 = vperm.slane %v80, 2
    %v512 = vperm.slane %v81, 2
    %v513 = vperm.slane %v82, 2
    %v514 = vperm.slane %v83, 2
    %v515 = vmul.f32 %v503, %v511
    %v516 = vmul.f32 %v504, %v512
    %v517 = vmul.f32 %v505, %v513
    %v518 = vmul.f32 %v506, %v514
    %v519 = vmul.f32 %v507, %v511
    %v520 = vmul.f32 %v508, %v512
    %v521 = vmul.f32 %v509, %v513
    %v522 = vmul.f32 %v510, %v514
    %523 = vrot.lane.b32.xlu0 %v54, 112
    %v524 = vpop.permute.xlu0 %523
    %525 = vrot.lane.b32.xlu0 %v55, 112
    %v526 = vpop.permute.xlu0 %525
    %529 = vmatpush.xpose.msra.mxu0 0.0
    %530 = vmatpush.xpose.msra.mxu0 0.0
    %531 = vmatpush.xpose.msra.mxu0 0.0
    %532 = vmatpush.xpose.msra.mxu0 0.0
    %533 = vmatpush.xpose.msra.mxu0 0.0
    %534 = vmatpush.xpose.msra.mxu0 0.0
    %535 = vmatpush.xpose.msra.mxu0 0.0
    %536 = vmatpush.xpose.msra.mxu0 0.0
    %537 = vmatpush.xpose.msra.mxu0 0.0
    %538 = vmatpush.xpose.msra.mxu0 0.0
    %539 = vmatpush.xpose.msra.mxu0 0.0
    %540 = vmatpush.xpose.msra.mxu0 0.0
    %541 = vmatpush.xpose.msra.mxu0 0.0
    %542 = vmatpush.xpose.msra.mxu0 0.0
    %543 = vmatpush.xpose.msra.mxu0 %v76
    %544 = vmatpush.xpose.msra.mxu0 %v72
    %545 = vmatmul.f32.gmra.mxu0 %v515
    %v546 = vpop.f32.mrf.mxu0
    %v547 = vadd.f32 %v524, %v546
    %548 = vmatmul.f32.gmra.mxu0 %v519
    %v549 = vpop.f32.mrf.mxu0
    %v550 = vadd.f32 %v526, %v549
    %551 = vdwg.mxu0
    %552 = vmatpush.xpose.msra.mxu0 0.0
    %553 = vmatpush.xpose.msra.mxu0 0.0
    %554 = vmatpush.xpose.msra.mxu0 0.0
    %555 = vmatpush.xpose.msra.mxu0 0.0
    %556 = vmatpush.xpose.msra.mxu0 0.0
    %557 = vmatpush.xpose.msra.mxu0 0.0
    %558 = vmatpush.xpose.msra.mxu0 0.0
    %559 = vmatpush.xpose.msra.mxu0 0.0
    %560 = vmatpush.xpose.msra.mxu0 0.0
    %561 = vmatpush.xpose.msra.mxu0 0.0
    %562 = vmatpush.xpose.msra.mxu0 0.0
    %563 = vmatpush.xpose.msra.mxu0 0.0
    %564 = vmatpush.xpose.msra.mxu0 0.0
    %565 = vmatpush.xpose.msra.mxu0 0.0
    %566 = vmatpush.xpose.msra.mxu0 %v77
    %567 = vmatpush.xpose.msra.mxu0 %v73
    %568 = vmatmul.f32.gmra.mxu0 %v516
    %v569 = vpop.f32.mrf.mxu0
    %v570 = vadd.f32 %v547, %v569
    %571 = vmatmul.f32.gmra.mxu0 %v520
    %v572 = vpop.f32.mrf.mxu0
    %v573 = vadd.f32 %v550, %v572
    %574 = vdwg.mxu0
    %575 = vmatpush.xpose.msra.mxu0 0.0
    %576 = vmatpush.xpose.msra.mxu0 0.0
    %577 = vmatpush.xpose.msra.mxu0 0.0
    %578 = vmatpush.xpose.msra.mxu0 0.0
    %579 = vmatpush.xpose.msra.mxu0 0.0
    %580 = vmatpush.xpose.msra.mxu0 0.0
    %581 = vmatpush.xpose.msra.mxu0 0.0
    %582 = vmatpush.xpose.msra.mxu0 0.0
    %583 = vmatpush.xpose.msra.mxu0 0.0
    %584 = vmatpush.xpose.msra.mxu0 0.0
    %585 = vmatpush.xpose.msra.mxu0 0.0
    %586 = vmatpush.xpose.msra.mxu0 0.0
    %587 = vmatpush.xpose.msra.mxu0 0.0
    %588 = vmatpush.xpose.msra.mxu0 0.0
    %589 = vmatpush.xpose.msra.mxu0 %v78
    %590 = vmatpush.xpose.msra.mxu0 %v74
    %591 = vmatmul.f32.gmra.mxu0 %v517
    %v592 = vpop.f32.mrf.mxu0
    %v593 = vadd.f32 %v570, %v592
    %594 = vmatmul.f32.gmra.mxu0 %v521
    %v595 = vpop.f32.mrf.mxu0
    %v596 = vadd.f32 %v573, %v595
    %597 = vdwg.mxu0
    %598 = vmatpush.xpose.msra.mxu0 0.0
    %599 = vmatpush.xpose.msra.mxu0 0.0
    %600 = vmatpush.xpose.msra.mxu0 0.0
    %601 = vmatpush.xpose.msra.mxu0 0.0
    %602 = vmatpush.xpose.msra.mxu0 0.0
    %603 = vmatpush.xpose.msra.mxu0 0.0
    %604 = vmatpush.xpose.msra.mxu0 0.0
    %605 = vmatpush.xpose.msra.mxu0 0.0
    %606 = vmatpush.xpose.msra.mxu0 0.0
    %607 = vmatpush.xpose.msra.mxu0 0.0
    %608 = vmatpush.xpose.msra.mxu0 0.0
    %609 = vmatpush.xpose.msra.mxu0 0.0
    %610 = vmatpush.xpose.msra.mxu0 0.0
    %611 = vmatpush.xpose.msra.mxu0 0.0
    %612 = vmatpush.xpose.msra.mxu0 %v79
    %613 = vmatpush.xpose.msra.mxu0 %v75
    %614 = vmatmul.f32.gmra.mxu0 %v518
    %v615 = vpop.f32.mrf.mxu0
    %v616 = vadd.f32 %v593, %v615
    %617 = vmatmul.f32.gmra.mxu0 %v522
    %v618 = vpop.f32.mrf.mxu0
    %v619 = vadd.f32 %v596, %v618
    %620 = vdwg.mxu0
    %v621 = vsel %vm268, %v616, -inf
    %622 = vmax.xlane.f32.xlu0 %v621
    %v623 = vpop.xlane.xlu0 %622
    %v624 = vsel %vm268, %v619, -inf
    %625 = vmax.xlane.f32.xlu0 %v624
    %v626 = vpop.xlane.xlu0 %625
    %v627 = vsub.f32 %v616, %v623
    %v628 = vsub.f32 %v619, %v626
    %v629 = vmul.f32 %v627, 1.442695
    %v630 = vpow.pop %v629
    %v631 = vmul.f32 %v628, 1.442695
    %v632 = vpow.pop %v631
    %v633 = vsel %vm268, %v630, 0.0
    %634 = vadd.xlane.f32.xlu0 %v633
    %v635 = vpop.xlane.xlu0 %634
    %v636 = vsel %vm268, %v632, 0.0
    %637 = vadd.xlane.f32.xlu0 %v636
    %v638 = vpop.xlane.xlu0 %637
    %v639 = vrcp.pop %v635
    %v640 = vmul.f32 %v635, %v639
    %v641 = vsub.f32 1.0, %v640
    %v642 = vmul.f32 %v639, %v641
    %v643 = vadd.f32 %v639, %v642
    %vm644 = vweird.f32 %v635
    %vm645 = vweird.f32 %v639
    %vm646 = vmor %vm644, %vm645
    %v647 = vsel %vm646, %v639, %v643
    %v648 = vand.u32 2147483647, %v635
    %vm649 = vcmp.eq.f32.partialorder %v648, 8.507059e+37
    %v650 = vand.u32 %v635, 2147483648
    %v651 = vor.u32 1.1754944e-38, %v650
    %v652 = vsel %vm649, %v651, %v647
    %v653 = vrcp.pop %v638
    %v654 = vmul.f32 %v638, %v653
    %v655 = vsub.f32 1.0, %v654
    %v656 = vmul.f32 %v653, %v655
    %v657 = vadd.f32 %v653, %v656
    %vm658 = vweird.f32 %v638
    %vm659 = vweird.f32 %v653
    %vm660 = vmor %vm658, %vm659
    %v661 = vsel %vm660, %v653, %v657
    %v662 = vand.u32 2147483647, %v638
    %vm663 = vcmp.eq.f32.partialorder %v662, 8.507059e+37
    %v664 = vand.u32 %v638, 2147483648
    %v665 = vor.u32 1.1754944e-38, %v664
    %v666 = vsel %vm663, %v665, %v661
    %v667 = vmul.f32 %v630, %v652
    %v668 = vmul.f32 %v632, %v666
    %v669 = vperm.slane %v84, 2
    %v671 = vsel %vm268, %v667, 0
    %v674 = vsel %vm268, %v668, 0
    %676 = vmatpush.msra.mxu0 0.0
    %677 = vmatpush.msra.mxu0 0.0
    %678 = vmatpush.msra.mxu0 0.0
    %679 = vmatpush.msra.mxu0 0.0
    %680 = vmatpush.msra.mxu0 0.0
    %681 = vmatpush.msra.mxu0 0.0
    %682 = vmatpush.msra.mxu0 0.0
    %683 = vmatpush.msra.mxu0 0.0
    %684 = vmatpush.msra.mxu0 0.0
    %685 = vmatpush.msra.mxu0 0.0
    %686 = vmatpush.msra.mxu0 0.0
    %687 = vmatpush.msra.mxu0 0.0
    %688 = vmatpush.msra.mxu0 0.0
    %689 = vmatpush.msra.mxu0 0.0
    %690 = vmatpush.msra.mxu0 %v131
    %691 = vmatpush.msra.mxu0 %v128
    %692 = vmatmul.f32.gmra.mxu0 %v671
    %v693 = vpop.f32.mrf.mxu0
    %v694 = vadd.f32 %v669, %v693
    %695 = vmatmul.f32.gmra.mxu0 %v674
    %v696 = vpop.f32.mrf.mxu0
    %v697 = vadd.f32 %v669, %v696
    %698 = vdwg.mxu0
    %699 = vrot.lane.b32.xlu0 %v128, 64
    %v700 = vpop.permute.xlu0 %699
    %701 = vrot.lane.b32.xlu0 %v131, 64
    %v702 = vpop.permute.xlu0 %701
    %v705 = vadd.f32 %v694, %v700
    %v706 = vadd.f32 %v697, %v702
    %vm707 = vcmp.gt.f32.partialorder %v705, 0.0
    %vm708 = vcmp.gt.f32.partialorder %v706, 0.0
    %v709 = vmin.f32 %v705, 0.0
    %v710 = vmin.f32 %v706, 0.0
    %v711 = vmul.f32 %v709, 1.442695
    %v712 = vpow.pop %v711
    %v713 = vmul.f32 %v710, 1.442695
    %v714 = vpow.pop %v713
    %v715 = vsub.f32 %v712, 1.0
    %v716 = vsub.f32 %v714, 1.0
    %v717 = vsel %vm707, %v705, %v715
    %v718 = vsel %vm708, %v706, %v716
    %v719 = vperm.slane %v84, 1
    %v721 = vsel %vm133, %v717, 0
    %v724 = vsel %vm133, %v718, 0
    %726 = vmatpush.msra.mxu0 0.0
    %727 = vmatpush.msra.mxu0 0.0
    %728 = vmatpush.msra.mxu0 0.0
    %729 = vmatpush.msra.mxu0 0.0
    %730 = vmatpush.msra.mxu0 0.0
    %731 = vmatpush.msra.mxu0 0.0
    %732 = vmatpush.msra.mxu0 0.0
    %733 = vmatpush.msra.mxu0 0.0
    %734 = vmatpush.msra.mxu0 0.0
    %735 = vmatpush.msra.mxu0 0.0
    %736 = vmatpush.msra.mxu0 0.0
    %737 = vmatpush.msra.mxu0 0.0
    %738 = vmatpush.msra.mxu0 %v89
    %739 = vmatpush.msra.mxu0 %v88
    %740 = vmatpush.msra.mxu0 %v87
    %741 = vmatpush.msra.mxu0 %v86
    %742 = vmatmul.f32.gmra.mxu0 %v721
    %v743 = vpop.f32.mrf.mxu0
    %v744 = vadd.f32 %v719, %v743
    %745 = vmatmul.f32.gmra.mxu0 %v724
    %v746 = vpop.f32.mrf.mxu0
    %v747 = vadd.f32 %v719, %v746
    %748 = vdwg.mxu0
    %v750 = vsel %vm133, %v744, 0
    %v753 = vsel %vm133, %v747, 0
    %755 = vmatpush.msra.mxu0 0.0
    %756 = vmatpush.msra.mxu0 0.0
    %757 = vmatpush.msra.mxu0 0.0
    %758 = vmatpush.msra.mxu0 0.0
    %759 = vmatpush.msra.mxu0 0.0
    %760 = vmatpush.msra.mxu0 0.0
    %761 = vmatpush.msra.mxu0 0.0
    %762 = vmatpush.msra.mxu0 0.0
    %763 = vmatpush.msra.mxu0 0.0
    %764 = vmatpush.msra.mxu0 0.0
    %765 = vmatpush.msra.mxu0 0.0
    %766 = vmatpush.msra.mxu0 0.0
    %767 = vmatpush.msra.mxu0 %v68
    %768 = vmatpush.msra.mxu0 %v64
    %769 = vmatpush.msra.mxu0 %v60
    %770 = vmatpush.msra.mxu0 %v56
    %771 = vmatmul.f32.gmra.mxu0 %v750
    %v772 = vpop.f32.mrf.mxu0
    %v773 = vadd.f32 0.0, %v772
    %774 = vmatmul.f32.gmra.mxu0 %v753
    %v775 = vpop.f32.mrf.mxu0
    %v776 = vadd.f32 0.0, %v775
    %777 = vdwg.mxu0
    %778 = vmatpush.msra.mxu0 0.0
    %779 = vmatpush.msra.mxu0 0.0
    %780 = vmatpush.msra.mxu0 0.0
    %781 = vmatpush.msra.mxu0 0.0
    %782 = vmatpush.msra.mxu0 0.0
    %783 = vmatpush.msra.mxu0 0.0
    %784 = vmatpush.msra.mxu0 0.0
    %785 = vmatpush.msra.mxu0 0.0
    %786 = vmatpush.msra.mxu0 0.0
    %787 = vmatpush.msra.mxu0 0.0
    %788 = vmatpush.msra.mxu0 0.0
    %789 = vmatpush.msra.mxu0 0.0
    %790 = vmatpush.msra.mxu0 %v69
    %791 = vmatpush.msra.mxu0 %v65
    %792 = vmatpush.msra.mxu0 %v61
    %793 = vmatpush.msra.mxu0 %v57
    %794 = vmatmul.f32.gmra.mxu0 %v750
    %v795 = vpop.f32.mrf.mxu0
    %v796 = vadd.f32 0.0, %v795
    %797 = vmatmul.f32.gmra.mxu0 %v753
    %v798 = vpop.f32.mrf.mxu0
    %v799 = vadd.f32 0.0, %v798
    %800 = vdwg.mxu0
    %801 = vmatpush.msra.mxu0 0.0
    %802 = vmatpush.msra.mxu0 0.0
    %803 = vmatpush.msra.mxu0 0.0
    %804 = vmatpush.msra.mxu0 0.0
    %805 = vmatpush.msra.mxu0 0.0
    %806 = vmatpush.msra.mxu0 0.0
    %807 = vmatpush.msra.mxu0 0.0
    %808 = vmatpush.msra.mxu0 0.0
    %809 = vmatpush.msra.mxu0 0.0
    %810 = vmatpush.msra.mxu0 0.0
    %811 = vmatpush.msra.mxu0 0.0
    %812 = vmatpush.msra.mxu0 0.0
    %813 = vmatpush.msra.mxu0 %v70
    %814 = vmatpush.msra.mxu0 %v66
    %815 = vmatpush.msra.mxu0 %v62
    %816 = vmatpush.msra.mxu0 %v58
    %817 = vmatmul.f32.gmra.mxu0 %v750
    %v818 = vpop.f32.mrf.mxu0
    %v819 = vadd.f32 0.0, %v818
    %820 = vmatmul.f32.gmra.mxu0 %v753
    %v821 = vpop.f32.mrf.mxu0
    %v822 = vadd.f32 0.0, %v821
    %823 = vdwg.mxu0
    %824 = vmatpush.msra.mxu0 0.0
    %825 = vmatpush.msra.mxu0 0.0
    %826 = vmatpush.msra.mxu0 0.0
    %827 = vmatpush.msra.mxu0 0.0
    %828 = vmatpush.msra.mxu0 0.0
    %829 = vmatpush.msra.mxu0 0.0
    %830 = vmatpush.msra.mxu0 0.0
    %831 = vmatpush.msra.mxu0 0.0
    %832 = vmatpush.msra.mxu0 0.0
    %833 = vmatpush.msra.mxu0 0.0
    %834 = vmatpush.msra.mxu0 0.0
    %835 = vmatpush.msra.mxu0 0.0
    %836 = vmatpush.msra.mxu0 %v71
    %837 = vmatpush.msra.mxu0 %v67
    %838 = vmatpush.msra.mxu0 %v63
    %839 = vmatpush.msra.mxu0 %v59
    %840 = vmatmul.f32.gmra.mxu0 %v750
    %v841 = vpop.f32.mrf.mxu0
    %v842 = vadd.f32 0.0, %v841
    %843 = vmatmul.f32.gmra.mxu0 %v753
    %v844 = vpop.f32.mrf.mxu0
    %v845 = vadd.f32 0.0, %v844
    %846 = vdwg.mxu0
    %v847 = vmul.f32 %v773, %v72
    %v848 = vmul.f32 %v796, %v73
    %v849 = vmul.f32 %v819, %v74
    %v850 = vmul.f32 %v842, %v75
    %v851 = vmul.f32 %v776, %v76
    %v852 = vmul.f32 %v799, %v77
    %v853 = vmul.f32 %v822, %v78
    %v854 = vmul.f32 %v845, %v79
    %v855 = vadd.f32 %v847, %v851
    %v856 = vrot.slane %v855, 4
    %v857 = vadd.f32 %v855, %v856
    %v858 = vrot.slane %v857, 2
    %v859 = vadd.f32 %v857, %v858
    %v860 = vrot.slane %v859, 1
    %v861 = vadd.f32 %v859, %v860
    %v862 = vadd.f32 %v848, %v852
    %v863 = vrot.slane %v862, 4
    %v864 = vadd.f32 %v862, %v863
    %v865 = vrot.slane %v864, 2
    %v866 = vadd.f32 %v864, %v865
    %v867 = vrot.slane %v866, 1
    %v868 = vadd.f32 %v866, %v867
    %v869 = vadd.f32 %v849, %v853
    %v870 = vrot.slane %v869, 4
    %v871 = vadd.f32 %v869, %v870
    %v872 = vrot.slane %v871, 2
    %v873 = vadd.f32 %v871, %v872
    %v874 = vrot.slane %v873, 1
    %v875 = vadd.f32 %v873, %v874
    %v876 = vadd.f32 %v850, %v854
    %v877 = vrot.slane %v876, 4
    %v878 = vadd.f32 %v876, %v877
    %v879 = vrot.slane %v878, 2
    %v880 = vadd.f32 %v878, %v879
    %v881 = vrot.slane %v880, 1
    %v882 = vadd.f32 %v880, %v881
    %v883 = vperm.slane %v80, 1
    %v884 = vperm.slane %v81, 1
    %v885 = vperm.slane %v82, 1
    %v886 = vperm.slane %v83, 1
    %v887 = vmul.f32 %v293, %v883
    %v888 = vmul.f32 %v316, %v884
    %v889 = vmul.f32 %v339, %v885
    %v890 = vmul.f32 %v362, %v886
    %v891 = vmul.f32 %v296, %v883
    %v892 = vmul.f32 %v319, %v884
    %v893 = vmul.f32 %v342, %v885
    %v894 = vmul.f32 %v365, %v886
    %895 = vrot.lane.b32.xlu0 %v744, 96
    %v896 = vpop.permute.xlu0 %895
    %897 = vrot.lane.b32.xlu0 %v747, 96
    %v898 = vpop.permute.xlu0 %897
    %v899 = vsel %vm133, %v896, 0
    %v901 = vsel %vm133, %v898, 0
    %903 = vmatpush.msra.mxu0 0.0
    %904 = vmatpush.msra.mxu0 0.0
    %905 = vmatpush.msra.mxu0 0.0
    %906 = vmatpush.msra.mxu0 0.0
    %907 = vmatpush.msra.mxu0 0.0
    %908 = vmatpush.msra.mxu0 0.0
    %909 = vmatpush.msra.mxu0 0.0
    %910 = vmatpush.msra.mxu0 0.0
    %911 = vmatpush.msra.mxu0 0.0
    %912 = vmatpush.msra.mxu0 0.0
    %913 = vmatpush.msra.mxu0 0.0
    %914 = vmatpush.msra.mxu0 0.0
    %915 = vmatpush.msra.mxu0 %v68
    %916 = vmatpush.msra.mxu0 %v64
    %917 = vmatpush.msra.mxu0 %v60
    %918 = vmatpush.msra.mxu0 %v56
    %919 = vmatmul.f32.gmra.mxu0 %v899
    %v920 = vpop.f32.mrf.mxu0
    %v921 = vadd.f32 %v861, %v920
    %922 = vmatmul.f32.gmra.mxu0 %v901
    %v923 = vpop.f32.mrf.mxu0
    %v924 = vadd.f32 %v861, %v923
    %925 = vdwg.mxu0
    %926 = vmatpush.msra.mxu0 0.0
    %927 = vmatpush.msra.mxu0 0.0
    %928 = vmatpush.msra.mxu0 0.0
    %929 = vmatpush.msra.mxu0 0.0
    %930 = vmatpush.msra.mxu0 0.0
    %931 = vmatpush.msra.mxu0 0.0
    %932 = vmatpush.msra.mxu0 0.0
    %933 = vmatpush.msra.mxu0 0.0
    %934 = vmatpush.msra.mxu0 0.0
    %935 = vmatpush.msra.mxu0 0.0
    %936 = vmatpush.msra.mxu0 0.0
    %937 = vmatpush.msra.mxu0 0.0
    %938 = vmatpush.msra.mxu0 %v69
    %939 = vmatpush.msra.mxu0 %v65
    %940 = vmatpush.msra.mxu0 %v61
    %941 = vmatpush.msra.mxu0 %v57
    %942 = vmatmul.f32.gmra.mxu0 %v899
    %v943 = vpop.f32.mrf.mxu0
    %v944 = vadd.f32 %v868, %v943
    %945 = vmatmul.f32.gmra.mxu0 %v901
    %v946 = vpop.f32.mrf.mxu0
    %v947 = vadd.f32 %v868, %v946
    %948 = vdwg.mxu0
    %949 = vmatpush.msra.mxu0 0.0
    %950 = vmatpush.msra.mxu0 0.0
    %951 = vmatpush.msra.mxu0 0.0
    %952 = vmatpush.msra.mxu0 0.0
    %953 = vmatpush.msra.mxu0 0.0
    %954 = vmatpush.msra.mxu0 0.0
    %955 = vmatpush.msra.mxu0 0.0
    %956 = vmatpush.msra.mxu0 0.0
    %957 = vmatpush.msra.mxu0 0.0
    %958 = vmatpush.msra.mxu0 0.0
    %959 = vmatpush.msra.mxu0 0.0
    %960 = vmatpush.msra.mxu0 0.0
    %961 = vmatpush.msra.mxu0 %v70
    %962 = vmatpush.msra.mxu0 %v66
    %963 = vmatpush.msra.mxu0 %v62
    %964 = vmatpush.msra.mxu0 %v58
    %965 = vmatmul.f32.gmra.mxu0 %v899
    %v966 = vpop.f32.mrf.mxu0
    %v967 = vadd.f32 %v875, %v966
    %968 = vmatmul.f32.gmra.mxu0 %v901
    %v969 = vpop.f32.mrf.mxu0
    %v970 = vadd.f32 %v875, %v969
    %971 = vdwg.mxu0
    %972 = vmatpush.msra.mxu0 0.0
    %973 = vmatpush.msra.mxu0 0.0
    %974 = vmatpush.msra.mxu0 0.0
    %975 = vmatpush.msra.mxu0 0.0
    %976 = vmatpush.msra.mxu0 0.0
    %977 = vmatpush.msra.mxu0 0.0
    %978 = vmatpush.msra.mxu0 0.0
    %979 = vmatpush.msra.mxu0 0.0
    %980 = vmatpush.msra.mxu0 0.0
    %981 = vmatpush.msra.mxu0 0.0
    %982 = vmatpush.msra.mxu0 0.0
    %983 = vmatpush.msra.mxu0 0.0
    %984 = vmatpush.msra.mxu0 %v71
    %985 = vmatpush.msra.mxu0 %v67
    %986 = vmatpush.msra.mxu0 %v63
    %987 = vmatpush.msra.mxu0 %v59
    %988 = vmatmul.f32.gmra.mxu0 %v899
    %v989 = vpop.f32.mrf.mxu0
    %v990 = vadd.f32 %v882, %v989
    %991 = vmatmul.f32.gmra.mxu0 %v901
    %v992 = vpop.f32.mrf.mxu0
    %v993 = vadd.f32 %v882, %v992
    %994 = vdwg.mxu0
    %v995 = vadd.f32 %v921, %v887
    %v996 = vadd.f32 %v944, %v888
    %v997 = vadd.f32 %v967, %v889
    %v998 = vadd.f32 %v990, %v890
    %v999 = vadd.f32 %v924, %v891
    %v1000 = vadd.f32 %v947, %v892
    %v1001 = vadd.f32 %v970, %v893
    %v1002 = vadd.f32 %v993, %v894
    %vm1003 = vcmp.gt.f32.partialorder %v995, 0.0
    %vm1004 = vcmp.gt.f32.partialorder %v996, 0.0
    %vm1005 = vcmp.gt.f32.partialorder %v997, 0.0
    %vm1006 = vcmp.gt.f32.partialorder %v998, 0.0
    %vm1007 = vcmp.gt.f32.partialorder %v999, 0.0
    %vm1008 = vcmp.gt.f32.partialorder %v1000, 0.0
    %vm1009 = vcmp.gt.f32.partialorder %v1001, 0.0
    %vm1010 = vcmp.gt.f32.partialorder %v1002, 0.0
    %v1011 = vmul.f32 %v995, 0.2
    %v1012 = vmul.f32 %v996, 0.2
    %v1013 = vmul.f32 %v997, 0.2
    %v1014 = vmul.f32 %v998, 0.2
    %v1015 = vmul.f32 %v999, 0.2
    %v1016 = vmul.f32 %v1000, 0.2
    %v1017 = vmul.f32 %v1001, 0.2
    %v1018 = vmul.f32 %v1002, 0.2
    %v1019 = vsel %vm1003, %v995, %v1011
    %v1020 = vsel %vm1004, %v996, %v1012
    %v1021 = vsel %vm1005, %v997, %v1013
    %v1022 = vsel %vm1006, %v998, %v1014
    %v1023 = vsel %vm1007, %v999, %v1015
    %v1024 = vsel %vm1008, %v1000, %v1016
    %v1025 = vsel %vm1009, %v1001, %v1017
    %v1026 = vsel %vm1010, %v1002, %v1018
    %v1027 = vperm.slane %v80, 3
    %v1028 = vperm.slane %v81, 3
    %v1029 = vperm.slane %v82, 3
    %v1030 = vperm.slane %v83, 3
    %v1031 = vmul.f32 %v1019, %v1027
    %v1032 = vmul.f32 %v1020, %v1028
    %v1033 = vmul.f32 %v1021, %v1029
    %v1034 = vmul.f32 %v1022, %v1030
    %v1035 = vmul.f32 %v1023, %v1027
    %v1036 = vmul.f32 %v1024, %v1028
    %v1037 = vmul.f32 %v1025, %v1029
    %v1038 = vmul.f32 %v1026, %v1030
    %1039 = vmatpush.xpose.msra.mxu0 0.0
    %1040 = vmatpush.xpose.msra.mxu0 0.0
    %1041 = vmatpush.xpose.msra.mxu0 0.0
    %1042 = vmatpush.xpose.msra.mxu0 0.0
    %1043 = vmatpush.xpose.msra.mxu0 0.0
    %1044 = vmatpush.xpose.msra.mxu0 0.0
    %1045 = vmatpush.xpose.msra.mxu0 0.0
    %1046 = vmatpush.xpose.msra.mxu0 0.0
    %1047 = vmatpush.xpose.msra.mxu0 0.0
    %1048 = vmatpush.xpose.msra.mxu0 0.0
    %1049 = vmatpush.xpose.msra.mxu0 0.0
    %1050 = vmatpush.xpose.msra.mxu0 0.0
    %1051 = vmatpush.xpose.msra.mxu0 0.0
    %1052 = vmatpush.xpose.msra.mxu0 0.0
    %1053 = vmatpush.xpose.msra.mxu0 %v76
    %1054 = vmatpush.xpose.msra.mxu0 %v72
    %1055 = vmatmul.f32.gmra.mxu0 %v1031
    %v1056 = vpop.f32.mrf.mxu0
    %v1057 = vadd.f32 %v524, %v1056
    %1058 = vmatmul.f32.gmra.mxu0 %v1035
    %v1059 = vpop.f32.mrf.mxu0
    %v1060 = vadd.f32 %v526, %v1059
    %1061 = vdwg.mxu0
    %1062 = vmatpush.xpose.msra.mxu0 0.0
    %1063 = vmatpush.xpose.msra.mxu0 0.0
    %1064 = vmatpush.xpose.msra.mxu0 0.0
    %1065 = vmatpush.xpose.msra.mxu0 0.0
    %1066 = vmatpush.xpose.msra.mxu0 0.0
    %1067 = vmatpush.xpose.msra.mxu0 0.0
    %1068 = vmatpush.xpose.msra.mxu0 0.0
    %1069 = vmatpush.xpose.msra.mxu0 0.0
    %1070 = vmatpush.xpose.msra.mxu0 0.0
    %1071 = vmatpush.xpose.msra.mxu0 0.0
    %1072 = vmatpush.xpose.msra.mxu0 0.0
    %1073 = vmatpush.xpose.msra.mxu0 0.0
    %1074 = vmatpush.xpose.msra.mxu0 0.0
    %1075 = vmatpush.xpose.msra.mxu0 0.0
    %1076 = vmatpush.xpose.msra.mxu0 %v77
    %1077 = vmatpush.xpose.msra.mxu0 %v73
    %1078 = vmatmul.f32.gmra.mxu0 %v1032
    %v1079 = vpop.f32.mrf.mxu0
    %v1080 = vadd.f32 %v1057, %v1079
    %1081 = vmatmul.f32.gmra.mxu0 %v1036
    %v1082 = vpop.f32.mrf.mxu0
    %v1083 = vadd.f32 %v1060, %v1082
    %1084 = vdwg.mxu0
    %1085 = vmatpush.xpose.msra.mxu0 0.0
    %1086 = vmatpush.xpose.msra.mxu0 0.0
    %1087 = vmatpush.xpose.msra.mxu0 0.0
    %1088 = vmatpush.xpose.msra.mxu0 0.0
    %1089 = vmatpush.xpose.msra.mxu0 0.0
    %1090 = vmatpush.xpose.msra.mxu0 0.0
    %1091 = vmatpush.xpose.msra.mxu0 0.0
    %1092 = vmatpush.xpose.msra.mxu0 0.0
    %1093 = vmatpush.xpose.msra.mxu0 0.0
    %1094 = vmatpush.xpose.msra.mxu0 0.0
    %1095 = vmatpush.xpose.msra.mxu0 0.0
    %1096 = vmatpush.xpose.msra.mxu0 0.0
    %1097 = vmatpush.xpose.msra.mxu0 0.0
    %1098 = vmatpush.xpose.msra.mxu0 0.0
    %1099 = vmatpush.xpose.msra.mxu0 %v78
    %1100 = vmatpush.xpose.msra.mxu0 %v74
    %1101 = vmatmul.f32.gmra.mxu0 %v1033
    %v1102 = vpop.f32.mrf.mxu0
    %v1103 = vadd.f32 %v1080, %v1102
    %1104 = vmatmul.f32.gmra.mxu0 %v1037
    %v1105 = vpop.f32.mrf.mxu0
    %v1106 = vadd.f32 %v1083, %v1105
    %1107 = vdwg.mxu0
    %1108 = vmatpush.xpose.msra.mxu0 0.0
    %1109 = vmatpush.xpose.msra.mxu0 0.0
    %1110 = vmatpush.xpose.msra.mxu0 0.0
    %1111 = vmatpush.xpose.msra.mxu0 0.0
    %1112 = vmatpush.xpose.msra.mxu0 0.0
    %1113 = vmatpush.xpose.msra.mxu0 0.0
    %1114 = vmatpush.xpose.msra.mxu0 0.0
    %1115 = vmatpush.xpose.msra.mxu0 0.0
    %1116 = vmatpush.xpose.msra.mxu0 0.0
    %1117 = vmatpush.xpose.msra.mxu0 0.0
    %1118 = vmatpush.xpose.msra.mxu0 0.0
    %1119 = vmatpush.xpose.msra.mxu0 0.0
    %1120 = vmatpush.xpose.msra.mxu0 0.0
    %1121 = vmatpush.xpose.msra.mxu0 0.0
    %1122 = vmatpush.xpose.msra.mxu0 %v79
    %1123 = vmatpush.xpose.msra.mxu0 %v75
    %1124 = vmatmul.f32.gmra.mxu0 %v1034
    %v1125 = vpop.f32.mrf.mxu0
    %v1126 = vadd.f32 %v1103, %v1125
    %1127 = vmatmul.f32.gmra.mxu0 %v1038
    %v1128 = vpop.f32.mrf.mxu0
    %v1129 = vadd.f32 %v1106, %v1128
    %1130 = vdwg.mxu0
    %v1131 = vsel %vm268, %v1126, -inf
    %1132 = vmax.xlane.f32.xlu0 %v1131
    %v1133 = vpop.xlane.xlu0 %1132
    %v1134 = vsel %vm268, %v1129, -inf
    %1135 = vmax.xlane.f32.xlu0 %v1134
    %v1136 = vpop.xlane.xlu0 %1135
    %v1137 = vsub.f32 %v1126, %v1133
    %v1138 = vsub.f32 %v1129, %v1136
    %v1139 = vmul.f32 %v1137, 1.442695
    %v1140 = vpow.pop %v1139
    %v1141 = vmul.f32 %v1138, 1.442695
    %v1142 = vpow.pop %v1141
    %v1143 = vsel %vm268, %v1140, 0.0
    %1144 = vadd.xlane.f32.xlu0 %v1143
    %v1145 = vpop.xlane.xlu0 %1144
    %v1146 = vsel %vm268, %v1142, 0.0
    %1147 = vadd.xlane.f32.xlu0 %v1146
    %v1148 = vpop.xlane.xlu0 %1147
    %v1149 = vrcp.pop %v1145
    %v1150 = vmul.f32 %v1145, %v1149
    %v1151 = vsub.f32 1.0, %v1150
    %v1152 = vmul.f32 %v1149, %v1151
    %v1153 = vadd.f32 %v1149, %v1152
    %vm1154 = vweird.f32 %v1145
    %vm1155 = vweird.f32 %v1149
    %vm1156 = vmor %vm1154, %vm1155
    %v1157 = vsel %vm1156, %v1149, %v1153
    %v1158 = vand.u32 2147483647, %v1145
    %vm1159 = vcmp.eq.f32.partialorder %v1158, 8.507059e+37
    %v1160 = vand.u32 %v1145, 2147483648
    %v1161 = vor.u32 1.1754944e-38, %v1160
    %v1162 = vsel %vm1159, %v1161, %v1157
    %v1163 = vrcp.pop %v1148
    %v1164 = vmul.f32 %v1148, %v1163
    %v1165 = vsub.f32 1.0, %v1164
    %v1166 = vmul.f32 %v1163, %v1165
    %v1167 = vadd.f32 %v1163, %v1166
    %vm1168 = vweird.f32 %v1148
    %vm1169 = vweird.f32 %v1163
    %vm1170 = vmor %vm1168, %vm1169
    %v1171 = vsel %vm1170, %v1163, %v1167
    %v1172 = vand.u32 2147483647, %v1148
    %vm1173 = vcmp.eq.f32.partialorder %v1172, 8.507059e+37
    %v1174 = vand.u32 %v1148, 2147483648
    %v1175 = vor.u32 1.1754944e-38, %v1174
    %v1176 = vsel %vm1173, %v1175, %v1171
    %v1177 = vmul.f32 %v1140, %v1162
    %v1178 = vmul.f32 %v1142, %v1176
    %v1179 = vperm.slane %v84, 3
    %v1181 = vsel %vm268, %v1177, 0
    %v1184 = vsel %vm268, %v1178, 0
    %1186 = vmatpush.msra.mxu0 0.0
    %1187 = vmatpush.msra.mxu0 0.0
    %1188 = vmatpush.msra.mxu0 0.0
    %1189 = vmatpush.msra.mxu0 0.0
    %1190 = vmatpush.msra.mxu0 0.0
    %1191 = vmatpush.msra.mxu0 0.0
    %1192 = vmatpush.msra.mxu0 0.0
    %1193 = vmatpush.msra.mxu0 0.0
    %1194 = vmatpush.msra.mxu0 0.0
    %1195 = vmatpush.msra.mxu0 0.0
    %1196 = vmatpush.msra.mxu0 0.0
    %1197 = vmatpush.msra.mxu0 0.0
    %1198 = vmatpush.msra.mxu0 0.0
    %1199 = vmatpush.msra.mxu0 0.0
    %1200 = vmatpush.msra.mxu0 %v747
    %1201 = vmatpush.msra.mxu0 %v744
    %1202 = vmatmul.f32.gmra.mxu0 %v1181
    %v1203 = vpop.f32.mrf.mxu0
    %v1204 = vadd.f32 %v1179, %v1203
    %1205 = vmatmul.f32.gmra.mxu0 %v1184
    %v1206 = vpop.f32.mrf.mxu0
    %v1207 = vadd.f32 %v1179, %v1206
    %1208 = vdwg.mxu0
    %v1209 = vadd.f32 %v1204, %v717
    %v1210 = vadd.f32 %v1207, %v718
    %vm1211 = vcmp.gt.f32.partialorder %v1209, 0.0
    %vm1212 = vcmp.gt.f32.partialorder %v1210, 0.0
    %v1213 = vmin.f32 %v1209, 0.0
    %v1214 = vmin.f32 %v1210, 0.0
    %v1215 = vmul.f32 %v1213, 1.442695
    %v1216 = vpow.pop %v1215
    %v1217 = vmul.f32 %v1214, 1.442695
    %v1218 = vpow.pop %v1217
    %v1219 = vsub.f32 %v1216, 1.0
    %v1220 = vsub.f32 %v1218, 1.0
    %v1221 = vsel %vm1211, %v1209, %v1219
    %v1222 = vsel %vm1212, %v1210, %v1220
    %v1223 = vperm.slane %v84, 4
    %v1225 = vsel %vm133, %v1221, 0
    %v1228 = vsel %vm133, %v1222, 0
    %1230 = vmatpush.msra.mxu0 0.0
    %1231 = vmatpush.msra.mxu0 0.0
    %1232 = vmatpush.msra.mxu0 0.0
    %1233 = vmatpush.msra.mxu0 0.0
    %1234 = vmatpush.msra.mxu0 0.0
    %1235 = vmatpush.msra.mxu0 0.0
    %1236 = vmatpush.msra.mxu0 0.0
    %1237 = vmatpush.msra.mxu0 0.0
    %1238 = vmatpush.msra.mxu0 0.0
    %1239 = vmatpush.msra.mxu0 0.0
    %1240 = vmatpush.msra.mxu0 0.0
    %1241 = vmatpush.msra.mxu0 0.0
    %1242 = vmatpush.msra.mxu0 %v93
    %1243 = vmatpush.msra.mxu0 %v92
    %1244 = vmatpush.msra.mxu0 %v91
    %1245 = vmatpush.msra.mxu0 %v90
    %1246 = vmatmul.f32.gmra.mxu0 %v1225
    %v1247 = vpop.f32.mrf.mxu0
    %v1248 = vadd.f32 %v1223, %v1247
    %1249 = vmatmul.f32.gmra.mxu0 %v1228
    %v1250 = vpop.f32.mrf.mxu0
    %v1251 = vadd.f32 %v1223, %v1250
    %1252 = vdwg.mxu0
    %v1253 = vmax.f32 %v1248, 0.0
    %v1254 = vmax.f32 %v1251, 0.0
    %v1255 = vperm.slane %v84, 5
    %v1257 = vsel %vm133, %v1253, 0
    %v1260 = vsel %vm133, %v1254, 0
    %1262 = vmatpush.msra.mxu0 0.0
    %1263 = vmatpush.msra.mxu0 0.0
    %1264 = vmatpush.msra.mxu0 0.0
    %1265 = vmatpush.msra.mxu0 0.0
    %1266 = vmatpush.msra.mxu0 0.0
    %1267 = vmatpush.msra.mxu0 0.0
    %1268 = vmatpush.msra.mxu0 0.0
    %1269 = vmatpush.msra.mxu0 0.0
    %1270 = vmatpush.msra.mxu0 0.0
    %1271 = vmatpush.msra.mxu0 0.0
    %1272 = vmatpush.msra.mxu0 0.0
    %1273 = vmatpush.msra.mxu0 0.0
    %1274 = vmatpush.msra.mxu0 %v97
    %1275 = vmatpush.msra.mxu0 %v96
    %1276 = vmatpush.msra.mxu0 %v95
    %1277 = vmatpush.msra.mxu0 %v94
    %1278 = vmatmul.f32.gmra.mxu0 %v1257
    %v1279 = vpop.f32.mrf.mxu0
    %v1280 = vadd.f32 %v1255, %v1279
    %1281 = vmatmul.f32.gmra.mxu0 %v1260
    %v1282 = vpop.f32.mrf.mxu0
    %v1283 = vadd.f32 %v1255, %v1282
    %1284 = vdwg.mxu0
    %v1285 = vmax.f32 %v1280, 0.0
    %v1286 = vmax.f32 %v1283, 0.0
    %v1287 = vperm.slane %v84, 6
    %v1289 = vsel %vm133, %v1285, 0
    %v1292 = vsel %vm133, %v1286, 0
    %1294 = vmatpush.msra.mxu0 0.0
    %1295 = vmatpush.msra.mxu0 0.0
    %1296 = vmatpush.msra.mxu0 0.0
    %1297 = vmatpush.msra.mxu0 0.0
    %1298 = vmatpush.msra.mxu0 0.0
    %1299 = vmatpush.msra.mxu0 0.0
    %1300 = vmatpush.msra.mxu0 0.0
    %1301 = vmatpush.msra.mxu0 0.0
    %1302 = vmatpush.msra.mxu0 0.0
    %1303 = vmatpush.msra.mxu0 0.0
    %1304 = vmatpush.msra.mxu0 0.0
    %1305 = vmatpush.msra.mxu0 0.0
    %1306 = vmatpush.msra.mxu0 %v101
    %1307 = vmatpush.msra.mxu0 %v100
    %1308 = vmatpush.msra.mxu0 %v99
    %1309 = vmatpush.msra.mxu0 %v98
    %1310 = vmatmul.f32.gmra.mxu0 %v1289
    %v1311 = vpop.f32.mrf.mxu0
    %v1312 = vadd.f32 %v1287, %v1311
    %1313 = vmatmul.f32.gmra.mxu0 %v1292
    %v1314 = vpop.f32.mrf.mxu0
    %v1315 = vadd.f32 %v1287, %v1314
    %1316 = vdwg.mxu0
    %1317 = vst [vmem:[%s5] sm:$0xff] %v1312
    %1318 = vst [vmem:[%s5 + $0x8] sm:$0xff] %v1315
    // Predicated region
    $region30: #{gat_localization_forward.1} parent=1 // pred_check
      _
    $region31: #{gat_localization_forward.1} parent=1 // pred_check_branch
      %1320 = sbr.rel (0) target = $region33
    $region32: #{gat_localization_forward.1} parent=1 // pred_region
      _
    $region33: #{gat_localization_forward.1} parent=1 // pred_fallthru
      _
    // Predicated region
    $region34: #{gat_localization_forward.1} parent=1 // pred_check
      _
    $region35: #{gat_localization_forward.1} parent=1 // pred_check_branch
      %1322 = sbr.rel (0) target = $region37
    $region36: #{gat_localization_forward.1} parent=1 // pred_region
      _
    $region37: #{gat_localization_forward.1} parent=1 // pred_fallthru
      _
    %1323 = vsyncpa [#allocation3], 1
    %1324 = vsyncpa [#allocation5], 1

</llo_original>
